<compile_context>
chip_gen: v7x
topology: tpu7x:2x2x1
jax: 0.10.0
libtpu: 0.0.40
codegen_flags: <defaults>
</compile_context>

<pallas_src>
import jax
import jax.numpy as jnp
from jax.experimental import pallas as pl
from jax.experimental.pallas import tpu as pltpu  # noqa: F401  (TPU backend import)

# ----------------------------- model config ---------------------------------
VOCAB = 64
BATCH = 2
SEQ = 8
HIDDEN = 32
N_HEADS = 4
D_HEAD = HIDDEN // N_HEADS
FFN = 64
EPS = 1e-5


def _layernorm(x, gamma, beta):
    # x: (N, H), gamma/beta: (1, H)
    mean = jnp.mean(x, axis=-1, keepdims=True)
    var = jnp.mean((x - mean) ** 2, axis=-1, keepdims=True)
    inv = jax.lax.rsqrt(var + EPS)
    return (x - mean) * inv * gamma + beta


# ------------------------------ Pallas kernel --------------------------------
def encoder_kernel(ids_ref, tokw2_ref, w_in_ref, vec_ref, o_ref):
    B, S, H = o_ref.shape
    BS = B * S
    DH = H // N_HEADS

    # ---- unpack the fused operand slabs (static ref windows: no runtime cost) ----
    tok_emb = tokw2_ref[0:VOCAB, 0:H]              # (VOCAB, H)
    w2 = tokw2_ref[0:FFN, H:2 * H]                 # (FFN, H)

    wqkv = w_in_ref[:, 0:3 * H]                    # (H, 3H)
    wo = w_in_ref[:, 3 * H:4 * H]                  # (H, H)
    w1 = w_in_ref[:, 4 * H:4 * H + FFN]            # (H, FFN)

    bqkv = vec_ref[0:1, 0:3 * H]                   # (1, 3H)
    b1 = vec_ref[1:2, 0:FFN]                       # (1, FFN)
    bo = vec_ref[2:3, 0:H]
    b2 = vec_ref[2:3, H:2 * H]
    g1 = vec_ref[2:3, 2 * H:3 * H]
    be1 = vec_ref[3:4, 0:H]
    g2 = vec_ref[3:4, H:2 * H]
    be2 = vec_ref[3:4, 2 * H:3 * H]
    pos = vec_ref[4:4 + S, 0:H]                    # (S, H)

    # ---- fused embedding: one-hot(ids) @ tok_emb on the MXU + positional add ----
    ids = ids_ref[...]                                              # (BS, 1) int32
    vocab_iota = jax.lax.broadcasted_iota(jnp.int32, (BS, VOCAB), 1)
    onehot = (vocab_iota == ids).astype(jnp.float32)                # (BS, VOCAB)
    x = jnp.dot(onehot, tok_emb, preferred_element_type=jnp.float32)
    x = x + jnp.tile(pos, (B, 1))                                   # (BS, H)

    # ---- fused QKV projection (one MXU push instead of three) ----
    qkv = jnp.dot(x, wqkv, preferred_element_type=jnp.float32) + bqkv
    q3 = qkv[:, 0 * H:1 * H].reshape(B, S, H)
    k3 = qkv[:, 1 * H:2 * H].reshape(B, S, H)
    v3 = qkv[:, 2 * H:3 * H].reshape(B, S, H)

    # ---- multi-head self-attention, batched over B within each head ----
    scale = 1.0 / (DH ** 0.5)
    head_outs = []
    for h in range(N_HEADS):        # static unroll; each head is an 8-lane slice
        sl = slice(h * DH, (h + 1) * DH)
        qh, kh, vh = q3[..., sl], k3[..., sl], v3[..., sl]          # (B, S, DH)
        s = jnp.einsum("bqd,bkd->bqk", qh, kh,
                       preferred_element_type=jnp.float32) * scale   # (B, S, S)
        s = s - jnp.max(s, axis=-1, keepdims=True)
        p = jnp.exp(s)
        p = p * pl.reciprocal(jnp.sum(p, axis=-1, keepdims=True), approx=True)
        head_outs.append(jnp.einsum("bqk,bkd->bqd", p, vh,
                                    preferred_element_type=jnp.float32))
    attn = jnp.concatenate(head_outs, axis=-1).reshape(BS, H)       # (BS, H)

    # ---- output projection + post-LN residual 1 ----
    attn = jnp.dot(attn, wo, preferred_element_type=jnp.float32) + bo
    h1 = _layernorm(x + attn, g1, be1)

    # ---- feed-forward network + post-LN residual 2 ----
    ff = jnp.dot(h1, w1, preferred_element_type=jnp.float32) + b1
    ff = jax.nn.gelu(ff)
    ff = jnp.dot(ff, w2, preferred_element_type=jnp.float32) + b2
    out = _layernorm(h1 + ff, g2, be2)

    o_ref[...] = out.reshape(B, S, H).astype(o_ref.dtype)


@jax.jit
def encoder_forward(input_ids, packed):
    """input_ids: (B, S) int32 -> last_hidden_state (B, S, H) f32."""
    B, S = input_ids.shape
    H = HIDDEN
    ids2d = input_ids.reshape(B * S, 1).astype(jnp.int32)
    # No grid: one kernel step processes the whole batch; each operand is a
    # whole-array VMEM-resident block (4 input DMAs total).
    return pl.pallas_call(
        encoder_kernel,
        out_shape=jax.ShapeDtypeStruct((B, S, H), jnp.float32),
    )(ids2d, packed["tokw2"], packed["w_in"], packed["vec"])


# --------------------- synthetic inner model + wrapper -----------------------
def init_params(key):
    ks = jax.random.split(key, 12)
    s = 0.02
    return {
        "tok_emb": jax.random.normal(ks[0], (VOCAB, HIDDEN), jnp.float32) * s,
        "pos_emb": jax.random.normal(ks[1], (SEQ, HIDDEN), jnp.float32) * s,
        "wq": jax.random.normal(ks[2], (HIDDEN, HIDDEN), jnp.float32) * s,
        "wk": jax.random.normal(ks[3], (HIDDEN, HIDDEN), jnp.float32) * s,
        "wv": jax.random.normal(ks[4], (HIDDEN, HIDDEN), jnp.float32) * s,
        "wo": jax.random.normal(ks[5], (HIDDEN, HIDDEN), jnp.float32) * s,
        "w1": jax.random.normal(ks[6], (HIDDEN, FFN), jnp.float32) * s,
        "w2": jax.random.normal(ks[7], (FFN, HIDDEN), jnp.float32) * s,
        "bq": jnp.zeros((1, HIDDEN), jnp.float32),
        "bk": jnp.zeros((1, HIDDEN), jnp.float32),
        "bv": jnp.zeros((1, HIDDEN), jnp.float32),
        "bo": jnp.zeros((1, HIDDEN), jnp.float32),
        "b1": jnp.zeros((1, FFN), jnp.float32),
        "b2": jnp.zeros((1, HIDDEN), jnp.float32),
        "g1": jnp.ones((1, HIDDEN), jnp.float32),
        "be1": jnp.zeros((1, HIDDEN), jnp.float32),
        "g2": jnp.ones((1, HIDDEN), jnp.float32),
        "be2": jnp.zeros((1, HIDDEN), jnp.float32),
    }


def pack_params(p):
    """Pack separate logical params into 3 fused kernel operand slabs (done once)."""
    H = HIDDEN
    W = 3 * H  # slab width for the vector table (>= 3H and >= FFN)
    assert W >= FFN

    # (H, 4H + FFN): [Wq | Wk | Wv | Wo | W1]
    w_in = jnp.concatenate([p["wq"], p["wk"], p["wv"], p["wo"], p["w1"]], axis=1)

    # (max(VOCAB,FFN), 2H): [tok_emb | W2], zero-padded rows if sizes differ.
    rows = max(VOCAB, FFN)
    tok = jnp.zeros((rows, H), jnp.float32).at[:VOCAB].set(p["tok_emb"])
    w2 = jnp.zeros((rows, H), jnp.float32).at[:FFN].set(p["w2"])
    tokw2 = jnp.concatenate([tok, w2], axis=1)

    def row(v):  # pad a (1, k) row vector to (1, W)
        return jnp.pad(v, ((0, 0), (0, W - v.shape[1])))

    vec = jnp.concatenate([
        row(jnp.concatenate([p["bq"], p["bk"], p["bv"]], axis=1)),    # row 0: bqkv
        row(p["b1"]),                                                 # row 1: b1
        row(jnp.concatenate([p["bo"], p["b2"], p["g1"]], axis=1)),    # row 2
        row(jnp.concatenate([p["be1"], p["g2"], p["be2"]], axis=1)),  # row 3
        jnp.pad(p["pos_emb"], ((0, 0), (0, W - H))),                  # rows 4..4+S
    ], axis=0)                                                        # (4+S, 3H)

    return {"tokw2": tokw2, "w_in": w_in, "vec": vec}


def inner_model(input_ids, packed):
    """Synthetic HF-style encoder: returns a dict with 'last_hidden_state'."""
    return {"last_hidden_state": encoder_forward(input_ids, packed)}


class ModelWrapper:
    """JAX port of the PyTorch ModelWrapper: extract a key from dict outputs."""

    def __init__(self, model, output_key="last_hidden_state"):
        self.model = model
        self.output_key = output_key

    def __call__(self, input_ids):
        outputs = self.model(input_ids)
        if isinstance(outputs, dict):
            return outputs[self.output_key]
        elif hasattr(outputs, self.output_key):
            return getattr(outputs, self.output_key)
        else:
            if isinstance(outputs, (tuple, list)):
                return outputs[0]
            return outputs


# ------------------------- pure-JAX reference check --------------------------
def _ref_encoder_layer(x, p):
    def ln(v, g, b):
        m = jnp.mean(v, -1, keepdims=True)
        var = jnp.mean((v - m) ** 2, -1, keepdims=True)
        return (v - m) * jax.lax.rsqrt(var + EPS) * g + b

    q = x @ p["wq"] + p["bq"]
    k = x @ p["wk"] + p["bk"]
    v = x @ p["wv"] + p["bv"]
    B, S, H = x.shape
    qh = q.reshape(B, S, N_HEADS, D_HEAD).transpose(0, 2, 1, 3)
    kh = k.reshape(B, S, N_HEADS, D_HEAD).transpose(0, 2, 1, 3)
    vh = v.reshape(B, S, N_HEADS, D_HEAD).transpose(0, 2, 1, 3)
    s = jnp.einsum("bhqd,bhkd->bhqk", qh, kh) / (D_HEAD ** 0.5)
    pattn = jax.nn.softmax(s, axis=-1)
    a = jnp.einsum("bhqk,bhkd->bhqd", pattn, vh).transpose(0, 2, 1, 3).reshape(B, S, H)
    h1 = ln(x + a @ p["wo"] + p["bo"], p["g1"], p["be1"])
    ff = jax.nn.gelu(h1 @ p["w1"] + p["b1"]) @ p["w2"] + p["b2"]
    return ln(h1 + ff, p["g2"], p["be2"])


if __name__ == "__main__":
    key = jax.random.PRNGKey(0)
    pkey, ikey = jax.random.split(key)
    params = init_params(pkey)
    packed = pack_params(params)
    input_ids = jax.random.randint(ikey, (BATCH, SEQ), 0, VOCAB, dtype=jnp.int32)

    # TODO(synk): the original wrapper wraps an arbitrary pretrained HF encoder
    # downloaded from the hub; here a deterministic synthetic single-layer encoder
    # stands in, with identical dict-output / 'last_hidden_state' extraction.
    wrapper = ModelWrapper(lambda ids: inner_model(ids, packed),
                           output_key="last_hidden_state")
    out = wrapper(input_ids)
    out = jax.block_until_ready(out)

    assert out.shape == (BATCH, SEQ, HIDDEN), out.shape
    assert out.dtype == jnp.float32

    # correctness check against pure-JAX reference (unpacked params)
    x_emb = jnp.take(params["tok_emb"], input_ids, axis=0) + params["pos_emb"][None]
    ref = _ref_encoder_layer(x_emb, params)
    assert jnp.allclose(out, ref, atol=1e-4, rtol=1e-4), \
        float(jnp.max(jnp.abs(out - ref)))

    print("KERNEL_OK")
</pallas_src>

<mosaic_0001>
module attributes {stable_mosaic.version = 11 : i64} {
  func.func @encoder_kernel(%arg0: memref<16x1xi32, #tpu.memory_space<vmem>>, %arg1: memref<64x64xf32, #tpu.memory_space<vmem>>, %arg2: memref<32x192xf32, #tpu.memory_space<vmem>>, %arg3: memref<12x96xf32, #tpu.memory_space<vmem>>, %arg4: memref<2x8x32xf32, #tpu.memory_space<vmem>>) attributes {dimension_semantics = [], scalar_prefetch = 0 : i64, scratch_operands = 0 : i64, tpu.core_type = #tpu.core_type<tc>} {
    %c0 = arith.constant 0 : index
    %c0_0 = arith.constant 0 : index
    %0 = vector.load %arg1[%c0, %c0_0] : memref<64x64xf32, #tpu.memory_space<vmem>>, vector<64x32xf32>
    %c0_1 = arith.constant 0 : index
    %c32 = arith.constant 32 : index
    %1 = vector.load %arg1[%c0_1, %c32] : memref<64x64xf32, #tpu.memory_space<vmem>>, vector<64x32xf32>
    %c0_2 = arith.constant 0 : index
    %c0_3 = arith.constant 0 : index
    %2 = vector.load %arg2[%c0_2, %c0_3] : memref<32x192xf32, #tpu.memory_space<vmem>>, vector<32x96xf32>
    %c0_4 = arith.constant 0 : index
    %c96 = arith.constant 96 : index
    %3 = vector.load %arg2[%c0_4, %c96] : memref<32x192xf32, #tpu.memory_space<vmem>>, vector<32x32xf32>
    %c0_5 = arith.constant 0 : index
    %c128 = arith.constant 128 : index
    %4 = vector.load %arg2[%c0_5, %c128] : memref<32x192xf32, #tpu.memory_space<vmem>>, vector<32x64xf32>
    %c0_6 = arith.constant 0 : index
    %c0_7 = arith.constant 0 : index
    %5 = vector.load %arg3[%c0_6, %c0_7] : memref<12x96xf32, #tpu.memory_space<vmem>>, vector<1x96xf32>
    %c1 = arith.constant 1 : index
    %c0_8 = arith.constant 0 : index
    %6 = vector.load %arg3[%c1, %c0_8] : memref<12x96xf32, #tpu.memory_space<vmem>>, vector<1x64xf32>
    %c2 = arith.constant 2 : index
    %c0_9 = arith.constant 0 : index
    %7 = vector.load %arg3[%c2, %c0_9] : memref<12x96xf32, #tpu.memory_space<vmem>>, vector<1x32xf32>
    %c2_10 = arith.constant 2 : index
    %c32_11 = arith.constant 32 : index
    %8 = vector.load %arg3[%c2_10, %c32_11] : memref<12x96xf32, #tpu.memory_space<vmem>>, vector<1x32xf32>
    %c2_12 = arith.constant 2 : index
    %c64 = arith.constant 64 : index
    %9 = vector.load %arg3[%c2_12, %c64] : memref<12x96xf32, #tpu.memory_space<vmem>>, vector<1x32xf32>
    %c3 = arith.constant 3 : index
    %c0_13 = arith.constant 0 : index
    %10 = vector.load %arg3[%c3, %c0_13] : memref<12x96xf32, #tpu.memory_space<vmem>>, vector<1x32xf32>
    %c3_14 = arith.constant 3 : index
    %c32_15 = arith.constant 32 : index
    %11 = vector.load %arg3[%c3_14, %c32_15] : memref<12x96xf32, #tpu.memory_space<vmem>>, vector<1x32xf32>
    %c3_16 = arith.constant 3 : index
    %c64_17 = arith.constant 64 : index
    %12 = vector.load %arg3[%c3_16, %c64_17] : memref<12x96xf32, #tpu.memory_space<vmem>>, vector<1x32xf32>
    %c4 = arith.constant 4 : index
    %c0_18 = arith.constant 0 : index
    %13 = vector.load %arg3[%c4, %c0_18] : memref<12x96xf32, #tpu.memory_space<vmem>>, vector<8x32xf32>
    %c0_19 = arith.constant 0 : index
    %c0_20 = arith.constant 0 : index
    %14 = vector.load %arg0[%c0_19, %c0_20] : memref<16x1xi32, #tpu.memory_space<vmem>>, vector<16x1xi32>
    %15 = tpu.iota {dimensions = array<i32: 1>} : vector<16x64xi32>
    %16 = vector.broadcast %14 : vector<16x1xi32> to vector<16x64xi32>
    %17 = arith.cmpi eq, %15, %16 : vector<16x64xi32>
    %18 = arith.extui %17 : vector<16x64xi1> to vector<16x64xi32>
    %19 = arith.sitofp %18 : vector<16x64xi32> to vector<16x64xf32>
    %cst = arith.constant dense<0.000000e+00> : vector<16x32xf32>
    %20 = tpu.matmul %19, %0, %cst {dimension_numbers = #tpu.dot_dimension_numbers<[1], [0], [0], [1], [0, 0, 1, 1], [], []>} : vector<16x64xf32>, vector<64x32xf32>, vector<16x32xf32> -> vector<16x32xf32>
    %21 = tpu.concatenate %13, %13 in 0 : vector<8x32xf32>, vector<8x32xf32> -> vector<16x32xf32>
    %22 = arith.addf %20, %21 : vector<16x32xf32>
    %cst_21 = arith.constant dense<0.000000e+00> : vector<16x96xf32>
    %23 = tpu.matmul %22, %2, %cst_21 {dimension_numbers = #tpu.dot_dimension_numbers<[1], [0], [0], [1], [0, 0, 1, 1], [], []>} : vector<16x32xf32>, vector<32x96xf32>, vector<16x96xf32> -> vector<16x96xf32>
    %24 = vector.broadcast %5 : vector<1x96xf32> to vector<16x96xf32>
    %25 = arith.addf %23, %24 : vector<16x96xf32>
    %26 = vector.extract_strided_slice %25 {offsets = [0, 0], sizes = [16, 32], strides = [1, 1]} : vector<16x96xf32> to vector<16x32xf32>
    %27 = vector.shape_cast %26 : vector<16x32xf32> to vector<2x8x32xf32>
    %28 = vector.extract_strided_slice %25 {offsets = [0, 32], sizes = [16, 32], strides = [1, 1]} : vector<16x96xf32> to vector<16x32xf32>
    %29 = vector.shape_cast %28 : vector<16x32xf32> to vector<2x8x32xf32>
    %30 = vector.extract_strided_slice %25 {offsets = [0, 64], sizes = [16, 32], strides = [1, 1]} : vector<16x96xf32> to vector<16x32xf32>
    %31 = vector.shape_cast %30 : vector<16x32xf32> to vector<2x8x32xf32>
    %32 = vector.extract_strided_slice %27 {offsets = [0, 0, 0], sizes = [2, 8, 8], strides = [1, 1, 1]} : vector<2x8x32xf32> to vector<2x8x8xf32>
    %33 = vector.extract_strided_slice %29 {offsets = [0, 0, 0], sizes = [2, 8, 8], strides = [1, 1, 1]} : vector<2x8x32xf32> to vector<2x8x8xf32>
    %34 = vector.extract_strided_slice %31 {offsets = [0, 0, 0], sizes = [2, 8, 8], strides = [1, 1, 1]} : vector<2x8x32xf32> to vector<2x8x8xf32>
    "tpu.trace_start"() <{level = 10 : i32, message = "bqd,bkd->bqk"}> : () -> ()
    %cst_22 = arith.constant dense<0.000000e+00> : vector<2x8x8xf32>
    %35 = tpu.matmul %32, %33, %cst_22 {dimension_numbers = #tpu.dot_dimension_numbers<[2], [2], [1], [1], [0, 0, 0, 1, 1, 1], [0], [0]>} : vector<2x8x8xf32>, vector<2x8x8xf32>, vector<2x8x8xf32> -> vector<2x8x8xf32>
    "tpu.trace_stop"() : () -> ()
    %cst_23 = arith.constant 0.353553385 : f32
    %36 = vector.broadcast %cst_23 : f32 to vector<2x8x8xf32>
    %37 = arith.mulf %35, %36 : vector<2x8x8xf32>
    %cst_24 = arith.constant dense<0xFF800000> : vector<2x8xf32>
    %38 = vector.multi_reduction <maximumf>, %37, %cst_24 [2] : vector<2x8x8xf32> to vector<2x8xf32>
    %39 = vector.shape_cast %38 : vector<2x8xf32> to vector<2x8x1xf32>
    %40 = vector.broadcast %39 : vector<2x8x1xf32> to vector<2x8x8xf32>
    %41 = arith.subf %37, %40 : vector<2x8x8xf32>
    %42 = math.exp %41 : vector<2x8x8xf32>
    %cst_25 = arith.constant dense<0.000000e+00> : vector<2x8xf32>
    %43 = vector.multi_reduction <add>, %42, %cst_25 [2] : vector<2x8x8xf32> to vector<2x8xf32>
    %44 = vector.shape_cast %43 : vector<2x8xf32> to vector<2x8x1xf32>
    %45 = tpu.reciprocal %44 {approx = true} : vector<2x8x1xf32> -> vector<2x8x1xf32>
    %46 = vector.broadcast %45 : vector<2x8x1xf32> to vector<2x8x8xf32>
    %47 = arith.mulf %42, %46 : vector<2x8x8xf32>
    "tpu.trace_start"() <{level = 10 : i32, message = "bqk,bkd->bqd"}> : () -> ()
    %cst_26 = arith.constant dense<0.000000e+00> : vector<2x8x8xf32>
    %48 = tpu.matmul %47, %34, %cst_26 {dimension_numbers = #tpu.dot_dimension_numbers<[2], [1], [1], [2], [0, 0, 0, 1, 1, 2], [0], [0]>} : vector<2x8x8xf32>, vector<2x8x8xf32>, vector<2x8x8xf32> -> vector<2x8x8xf32>
    "tpu.trace_stop"() : () -> ()
    %49 = vector.extract_strided_slice %27 {offsets = [0, 0, 8], sizes = [2, 8, 8], strides = [1, 1, 1]} : vector<2x8x32xf32> to vector<2x8x8xf32>
    %50 = vector.extract_strided_slice %29 {offsets = [0, 0, 8], sizes = [2, 8, 8], strides = [1, 1, 1]} : vector<2x8x32xf32> to vector<2x8x8xf32>
    %51 = vector.extract_strided_slice %31 {offsets = [0, 0, 8], sizes = [2, 8, 8], strides = [1, 1, 1]} : vector<2x8x32xf32> to vector<2x8x8xf32>
    "tpu.trace_start"() <{level = 10 : i32, message = "bqd,bkd->bqk"}> : () -> ()
    %cst_27 = arith.constant dense<0.000000e+00> : vector<2x8x8xf32>
    %52 = tpu.matmul %49, %50, %cst_27 {dimension_numbers = #tpu.dot_dimension_numbers<[2], [2], [1], [1], [0, 0, 0, 1, 1, 1], [0], [0]>} : vector<2x8x8xf32>, vector<2x8x8xf32>, vector<2x8x8xf32> -> vector<2x8x8xf32>
    "tpu.trace_stop"() : () -> ()
    %cst_28 = arith.constant 0.353553385 : f32
    %53 = vector.broadcast %cst_28 : f32 to vector<2x8x8xf32>
    %54 = arith.mulf %52, %53 : vector<2x8x8xf32>
    %cst_29 = arith.constant dense<0xFF800000> : vector<2x8xf32>
    %55 = vector.multi_reduction <maximumf>, %54, %cst_29 [2] : vector<2x8x8xf32> to vector<2x8xf32>
    %56 = vector.shape_cast %55 : vector<2x8xf32> to vector<2x8x1xf32>
    %57 = vector.broadcast %56 : vector<2x8x1xf32> to vector<2x8x8xf32>
    %58 = arith.subf %54, %57 : vector<2x8x8xf32>
    %59 = math.exp %58 : vector<2x8x8xf32>
    %cst_30 = arith.constant dense<0.000000e+00> : vector<2x8xf32>
    %60 = vector.multi_reduction <add>, %59, %cst_30 [2] : vector<2x8x8xf32> to vector<2x8xf32>
    %61 = vector.shape_cast %60 : vector<2x8xf32> to vector<2x8x1xf32>
    %62 = tpu.reciprocal %61 {approx = true} : vector<2x8x1xf32> -> vector<2x8x1xf32>
    %63 = vector.broadcast %62 : vector<2x8x1xf32> to vector<2x8x8xf32>
    %64 = arith.mulf %59, %63 : vector<2x8x8xf32>
    "tpu.trace_start"() <{level = 10 : i32, message = "bqk,bkd->bqd"}> : () -> ()
    %cst_31 = arith.constant dense<0.000000e+00> : vector<2x8x8xf32>
    %65 = tpu.matmul %64, %51, %cst_31 {dimension_numbers = #tpu.dot_dimension_numbers<[2], [1], [1], [2], [0, 0, 0, 1, 1, 2], [0], [0]>} : vector<2x8x8xf32>, vector<2x8x8xf32>, vector<2x8x8xf32> -> vector<2x8x8xf32>
    "tpu.trace_stop"() : () -> ()
    %66 = vector.extract_strided_slice %27 {offsets = [0, 0, 16], sizes = [2, 8, 8], strides = [1, 1, 1]} : vector<2x8x32xf32> to vector<2x8x8xf32>
    %67 = vector.extract_strided_slice %29 {offsets = [0, 0, 16], sizes = [2, 8, 8], strides = [1, 1, 1]} : vector<2x8x32xf32> to vector<2x8x8xf32>
    %68 = vector.extract_strided_slice %31 {offsets = [0, 0, 16], sizes = [2, 8, 8], strides = [1, 1, 1]} : vector<2x8x32xf32> to vector<2x8x8xf32>
    "tpu.trace_start"() <{level = 10 : i32, message = "bqd,bkd->bqk"}> : () -> ()
    %cst_32 = arith.constant dense<0.000000e+00> : vector<2x8x8xf32>
    %69 = tpu.matmul %66, %67, %cst_32 {dimension_numbers = #tpu.dot_dimension_numbers<[2], [2], [1], [1], [0, 0, 0, 1, 1, 1], [0], [0]>} : vector<2x8x8xf32>, vector<2x8x8xf32>, vector<2x8x8xf32> -> vector<2x8x8xf32>
    "tpu.trace_stop"() : () -> ()
    %cst_33 = arith.constant 0.353553385 : f32
    %70 = vector.broadcast %cst_33 : f32 to vector<2x8x8xf32>
    %71 = arith.mulf %69, %70 : vector<2x8x8xf32>
    %cst_34 = arith.constant dense<0xFF800000> : vector<2x8xf32>
    %72 = vector.multi_reduction <maximumf>, %71, %cst_34 [2] : vector<2x8x8xf32> to vector<2x8xf32>
    %73 = vector.shape_cast %72 : vector<2x8xf32> to vector<2x8x1xf32>
    %74 = vector.broadcast %73 : vector<2x8x1xf32> to vector<2x8x8xf32>
    %75 = arith.subf %71, %74 : vector<2x8x8xf32>
    %76 = math.exp %75 : vector<2x8x8xf32>
    %cst_35 = arith.constant dense<0.000000e+00> : vector<2x8xf32>
    %77 = vector.multi_reduction <add>, %76, %cst_35 [2] : vector<2x8x8xf32> to vector<2x8xf32>
    %78 = vector.shape_cast %77 : vector<2x8xf32> to vector<2x8x1xf32>
    %79 = tpu.reciprocal %78 {approx = true} : vector<2x8x1xf32> -> vector<2x8x1xf32>
    %80 = vector.broadcast %79 : vector<2x8x1xf32> to vector<2x8x8xf32>
    %81 = arith.mulf %76, %80 : vector<2x8x8xf32>
    "tpu.trace_start"() <{level = 10 : i32, message = "bqk,bkd->bqd"}> : () -> ()
    %cst_36 = arith.constant dense<0.000000e+00> : vector<2x8x8xf32>
    %82 = tpu.matmul %81, %68, %cst_36 {dimension_numbers = #tpu.dot_dimension_numbers<[2], [1], [1], [2], [0, 0, 0, 1, 1, 2], [0], [0]>} : vector<2x8x8xf32>, vector<2x8x8xf32>, vector<2x8x8xf32> -> vector<2x8x8xf32>
    "tpu.trace_stop"() : () -> ()
    %83 = vector.extract_strided_slice %27 {offsets = [0, 0, 24], sizes = [2, 8, 8], strides = [1, 1, 1]} : vector<2x8x32xf32> to vector<2x8x8xf32>
    %84 = vector.extract_strided_slice %29 {offsets = [0, 0, 24], sizes = [2, 8, 8], strides = [1, 1, 1]} : vector<2x8x32xf32> to vector<2x8x8xf32>
    %85 = vector.extract_strided_slice %31 {offsets = [0, 0, 24], sizes = [2, 8, 8], strides = [1, 1, 1]} : vector<2x8x32xf32> to vector<2x8x8xf32>
    "tpu.trace_start"() <{level = 10 : i32, message = "bqd,bkd->bqk"}> : () -> ()
    %cst_37 = arith.constant dense<0.000000e+00> : vector<2x8x8xf32>
    %86 = tpu.matmul %83, %84, %cst_37 {dimension_numbers = #tpu.dot_dimension_numbers<[2], [2], [1], [1], [0, 0, 0, 1, 1, 1], [0], [0]>} : vector<2x8x8xf32>, vector<2x8x8xf32>, vector<2x8x8xf32> -> vector<2x8x8xf32>
    "tpu.trace_stop"() : () -> ()
    %cst_38 = arith.constant 0.353553385 : f32
    %87 = vector.broadcast %cst_38 : f32 to vector<2x8x8xf32>
    %88 = arith.mulf %86, %87 : vector<2x8x8xf32>
    %cst_39 = arith.constant dense<0xFF800000> : vector<2x8xf32>
    %89 = vector.multi_reduction <maximumf>, %88, %cst_39 [2] : vector<2x8x8xf32> to vector<2x8xf32>
    %90 = vector.shape_cast %89 : vector<2x8xf32> to vector<2x8x1xf32>
    %91 = vector.broadcast %90 : vector<2x8x1xf32> to vector<2x8x8xf32>
    %92 = arith.subf %88, %91 : vector<2x8x8xf32>
    %93 = math.exp %92 : vector<2x8x8xf32>
    %cst_40 = arith.constant dense<0.000000e+00> : vector<2x8xf32>
    %94 = vector.multi_reduction <add>, %93, %cst_40 [2] : vector<2x8x8xf32> to vector<2x8xf32>
    %95 = vector.shape_cast %94 : vector<2x8xf32> to vector<2x8x1xf32>
    %96 = tpu.reciprocal %95 {approx = true} : vector<2x8x1xf32> -> vector<2x8x1xf32>
    %97 = vector.broadcast %96 : vector<2x8x1xf32> to vector<2x8x8xf32>
    %98 = arith.mulf %93, %97 : vector<2x8x8xf32>
    "tpu.trace_start"() <{level = 10 : i32, message = "bqk,bkd->bqd"}> : () -> ()
    %cst_41 = arith.constant dense<0.000000e+00> : vector<2x8x8xf32>
    %99 = tpu.matmul %98, %85, %cst_41 {dimension_numbers = #tpu.dot_dimension_numbers<[2], [1], [1], [2], [0, 0, 0, 1, 1, 2], [0], [0]>} : vector<2x8x8xf32>, vector<2x8x8xf32>, vector<2x8x8xf32> -> vector<2x8x8xf32>
    "tpu.trace_stop"() : () -> ()
    %100 = tpu.concatenate %48, %65, %82, %99 in 2 : vector<2x8x8xf32>, vector<2x8x8xf32>, vector<2x8x8xf32>, vector<2x8x8xf32> -> vector<2x8x32xf32>
    %101 = vector.shape_cast %100 : vector<2x8x32xf32> to vector<16x32xf32>
    %cst_42 = arith.constant dense<0.000000e+00> : vector<16x32xf32>
    %102 = tpu.matmul %101, %3, %cst_42 {dimension_numbers = #tpu.dot_dimension_numbers<[1], [0], [0], [1], [0, 0, 1, 1], [], []>} : vector<16x32xf32>, vector<32x32xf32>, vector<16x32xf32> -> vector<16x32xf32>
    %103 = vector.broadcast %7 : vector<1x32xf32> to vector<16x32xf32>
    %104 = arith.addf %102, %103 : vector<16x32xf32>
    %105 = arith.addf %22, %104 : vector<16x32xf32>
    %cst_43 = arith.constant dense<0.000000e+00> : vector<16xf32>
    %106 = vector.multi_reduction <add>, %105, %cst_43 [1] : vector<16x32xf32> to vector<16xf32>
    %107 = vector.shape_cast %106 : vector<16xf32> to vector<16x1xf32>
    %cst_44 = arith.constant 3.200000e+01 : f32
    %108 = vector.broadcast %cst_44 : f32 to vector<16x1xf32>
    %109 = arith.divf %107, %108 : vector<16x1xf32>
    %110 = vector.broadcast %109 : vector<16x1xf32> to vector<16x32xf32>
    %111 = arith.subf %105, %110 : vector<16x32xf32>
    %112 = arith.mulf %111, %111 : vector<16x32xf32>
    %cst_45 = arith.constant dense<0.000000e+00> : vector<16xf32>
    %113 = vector.multi_reduction <add>, %112, %cst_45 [1] : vector<16x32xf32> to vector<16xf32>
    %114 = vector.shape_cast %113 : vector<16xf32> to vector<16x1xf32>
    %cst_46 = arith.constant 3.200000e+01 : f32
    %115 = vector.broadcast %cst_46 : f32 to vector<16x1xf32>
    %116 = arith.divf %114, %115 : vector<16x1xf32>
    %cst_47 = arith.constant 9.99999974E-6 : f32
    %117 = vector.broadcast %cst_47 : f32 to vector<16x1xf32>
    %118 = arith.addf %116, %117 : vector<16x1xf32>
    %119 = math.rsqrt %118 : vector<16x1xf32>
    %120 = vector.broadcast %109 : vector<16x1xf32> to vector<16x32xf32>
    %121 = arith.subf %105, %120 : vector<16x32xf32>
    %122 = vector.broadcast %119 : vector<16x1xf32> to vector<16x32xf32>
    %123 = arith.mulf %121, %122 : vector<16x32xf32>
    %124 = vector.broadcast %9 : vector<1x32xf32> to vector<16x32xf32>
    %125 = arith.mulf %123, %124 : vector<16x32xf32>
    %126 = vector.broadcast %10 : vector<1x32xf32> to vector<16x32xf32>
    %127 = arith.addf %125, %126 : vector<16x32xf32>
    %cst_48 = arith.constant dense<0.000000e+00> : vector<16x64xf32>
    %128 = tpu.matmul %127, %4, %cst_48 {dimension_numbers = #tpu.dot_dimension_numbers<[1], [0], [0], [1], [0, 0, 1, 1], [], []>} : vector<16x32xf32>, vector<32x64xf32>, vector<16x64xf32> -> vector<16x64xf32>
    %129 = vector.broadcast %6 : vector<1x64xf32> to vector<16x64xf32>
    %130 = arith.addf %128, %129 : vector<16x64xf32>
    %131 = arith.mulf %130, %130 : vector<16x64xf32>
    %132 = arith.mulf %130, %131 : vector<16x64xf32>
    %cst_49 = arith.constant 4.471500e-02 : f32
    %133 = vector.broadcast %cst_49 : f32 to vector<16x64xf32>
    %134 = arith.mulf %133, %132 : vector<16x64xf32>
    %135 = arith.addf %130, %134 : vector<16x64xf32>
    %cst_50 = arith.constant 0.797884583 : f32
    %136 = vector.broadcast %cst_50 : f32 to vector<16x64xf32>
    %137 = arith.mulf %136, %135 : vector<16x64xf32>
    %138 = math.tanh %137 : vector<16x64xf32>
    %cst_51 = arith.constant 1.000000e+00 : f32
    %139 = vector.broadcast %cst_51 : f32 to vector<16x64xf32>
    %140 = arith.addf %139, %138 : vector<16x64xf32>
    %cst_52 = arith.constant 5.000000e-01 : f32
    %141 = vector.broadcast %cst_52 : f32 to vector<16x64xf32>
    %142 = arith.mulf %141, %140 : vector<16x64xf32>
    %143 = arith.mulf %130, %142 : vector<16x64xf32>
    %cst_53 = arith.constant dense<0.000000e+00> : vector<16x32xf32>
    %144 = tpu.matmul %143, %1, %cst_53 {dimension_numbers = #tpu.dot_dimension_numbers<[1], [0], [0], [1], [0, 0, 1, 1], [], []>} : vector<16x64xf32>, vector<64x32xf32>, vector<16x32xf32> -> vector<16x32xf32>
    %145 = vector.broadcast %8 : vector<1x32xf32> to vector<16x32xf32>
    %146 = arith.addf %144, %145 : vector<16x32xf32>
    %147 = arith.addf %127, %146 : vector<16x32xf32>
    %cst_54 = arith.constant dense<0.000000e+00> : vector<16xf32>
    %148 = vector.multi_reduction <add>, %147, %cst_54 [1] : vector<16x32xf32> to vector<16xf32>
    %149 = vector.shape_cast %148 : vector<16xf32> to vector<16x1xf32>
    %cst_55 = arith.constant 3.200000e+01 : f32
    %150 = vector.broadcast %cst_55 : f32 to vector<16x1xf32>
    %151 = arith.divf %149, %150 : vector<16x1xf32>
    %152 = vector.broadcast %151 : vector<16x1xf32> to vector<16x32xf32>
    %153 = arith.subf %147, %152 : vector<16x32xf32>
    %154 = arith.mulf %153, %153 : vector<16x32xf32>
    %cst_56 = arith.constant dense<0.000000e+00> : vector<16xf32>
    %155 = vector.multi_reduction <add>, %154, %cst_56 [1] : vector<16x32xf32> to vector<16xf32>
    %156 = vector.shape_cast %155 : vector<16xf32> to vector<16x1xf32>
    %cst_57 = arith.constant 3.200000e+01 : f32
    %157 = vector.broadcast %cst_57 : f32 to vector<16x1xf32>
    %158 = arith.divf %156, %157 : vector<16x1xf32>
    %cst_58 = arith.constant 9.99999974E-6 : f32
    %159 = vector.broadcast %cst_58 : f32 to vector<16x1xf32>
    %160 = arith.addf %158, %159 : vector<16x1xf32>
    %161 = math.rsqrt %160 : vector<16x1xf32>
    %162 = vector.broadcast %151 : vector<16x1xf32> to vector<16x32xf32>
    %163 = arith.subf %147, %162 : vector<16x32xf32>
    %164 = vector.broadcast %161 : vector<16x1xf32> to vector<16x32xf32>
    %165 = arith.mulf %163, %164 : vector<16x32xf32>
    %166 = vector.broadcast %11 : vector<1x32xf32> to vector<16x32xf32>
    %167 = arith.mulf %165, %166 : vector<16x32xf32>
    %168 = vector.broadcast %12 : vector<1x32xf32> to vector<16x32xf32>
    %169 = arith.addf %167, %168 : vector<16x32xf32>
    %170 = vector.shape_cast %169 : vector<16x32xf32> to vector<2x8x32xf32>
    %c0_59 = arith.constant 0 : index
    %c0_60 = arith.constant 0 : index
    %c0_61 = arith.constant 0 : index
    %171 = vector.load %arg4[%c0_59, %c0_60, %c0_61] : memref<2x8x32xf32, #tpu.memory_space<vmem>>, vector<2x8x32xf32>
    tpu.vector_store %arg4[%c0_59, %c0_60, %c0_61], %170 {strides = array<i32>} : memref<2x8x32xf32, #tpu.memory_space<vmem>>, vector<2x8x32xf32>,
    return
  }
}

</mosaic_0001>

<llo_original>
// kernel: encoder_forward.1
$region0: #{encoder_forward.1}
  #allocation0 [shape = 'u32[]', space=smem, size = 0x4, offset = 0x4, fixed_abs, tag = 'smem constant byte address 0x4 - core index']
  #allocation1 [shape = 'u32[144,128]{1,0:T(1,128)}', space=vmem, size = 0x12000, scoped, tag = 'internal scratch']
  %s0 = inlined_call_operand.vmem [shape: s32[16,1], index: 0, kind: input, shape index: {}]
  %s1 = inlined_call_operand.hbm [shape: f32[64,64], index: 1, kind: input, shape index: {}]
  %s2 = inlined_call_operand.hbm [shape: f32[32,192], index: 2, kind: input, shape index: {}]
  %s3 = inlined_call_operand.vmem [shape: f32[12,96], index: 3, kind: input, shape index: {}]
  %s4 = inlined_call_operand.hbm [shape: f32[2,8,32], index: 4, kind: output, shape index: {}]
  %s5 = sld [smem:[#allocation0]]
  $region34: #{encoder_forward.1} parent=0
    _
  %s7 = ssub.s32 1, %s5
  %s8 = scalar_select 0, %s7, %s5
  $region1: #{encoder_forward.1} parent=0
    #allocation2 [shape = 'u8[32768]{0}', space=vmem, size = 0x8000, scoped, tag = 'input window, operand 1, single buffered']
    #allocation3 [shape = 's32[1]{0}', space=sflag, size = 0x4, scoped, tag = 'scoped memory for encoder_forward.1']
    #allocation4 [shape = 's32[1]{0}', space=sflag, size = 0x4, scoped, tag = 'scoped memory for encoder_forward.1']
    #allocation5 [shape = 'u8[32768]{0}', space=vmem, size = 0x8000, scoped, tag = 'input window, operand 2, single buffered']
    #allocation6 [shape = 's32[1]{0}', space=sflag, size = 0x4, scoped, tag = 'scoped memory for encoder_forward.1']
    #allocation7 [shape = 'u8[8192]{0}', space=vmem, size = 0x2000, scoped, tag = 'output window, operand 0, single buffered']
    %9 = vsyncpa [#allocation3], 0
    %10 = vsyncpa [#allocation6], 0
    %11 = vsyncpa [#allocation4], 0
    // Predicated region
    $region2: #{encoder_forward.1} parent=1 // pred_check
      _
    $region3: #{encoder_forward.1} parent=1 // pred_check_branch
      %13 = sbr.rel (0) target = $region5
    $region4: #{encoder_forward.1} parent=1 // pred_region
      _
    $region5: #{encoder_forward.1} parent=1 // pred_fallthru
      _
    // Predicated region
    $region6: #{encoder_forward.1} parent=1 // pred_check
      _
    $region7: #{encoder_forward.1} parent=1 // pred_check_branch
      %15 = sbr.rel (0) target = $region9
    $region8: #{encoder_forward.1} parent=1 // pred_region
      %s17 = ssub.s32 1024, 1024
      %18 = vsyncadd [#allocation3], %s17
      %s19 = sshll.u32 [#allocation2], 4
      %s20 = int_to_ptr.vmem [resolvable:$true] %s19
      %25 = dma.hbm_to_vmem [thread:$0]  %s1, 1024, %s20, [#allocation3], 128, 128, 8
    $region9: #{encoder_forward.1} parent=1 // pred_fallthru
      _
    // Predicated region
    $region10: #{encoder_forward.1} parent=1 // pred_check
      _
    $region11: #{encoder_forward.1} parent=1 // pred_check_branch
      %27 = sbr.rel (0) target = $region13
    $region12: #{encoder_forward.1} parent=1 // pred_region
      %s29 = ssub.s32 1024, 1024
      %30 = vsyncadd [#allocation6], %s29
      %s31 = sshll.u32 [#allocation5], 4
      %s32 = int_to_ptr.vmem [resolvable:$true] %s31
      %37 = dma.hbm_to_vmem [thread:$0]  %s2, 1024, %s32, [#allocation6], 256, 256, 16
    $region13: #{encoder_forward.1} parent=1 // pred_fallthru
      _
    // Predicated region
    $region14: #{encoder_forward.1} parent=1 // pred_check
      _
    $region15: #{encoder_forward.1} parent=1 // pred_check_branch
      %39 = sbr.rel (0) target = $region17
    $region16: #{encoder_forward.1} parent=1 // pred_region
      _
    $region17: #{encoder_forward.1} parent=1 // pred_fallthru
      _
    // Predicated region
    $region18: #{encoder_forward.1} parent=1 // pred_check
      _
    $region19: #{encoder_forward.1} parent=1 // pred_check_branch
      %41 = sbr.rel (0) target = $region21
    $region20: #{encoder_forward.1} parent=1 // pred_region
      %42 = dma.done [#allocation3], 1024
    $region21: #{encoder_forward.1} parent=1 // pred_fallthru
      _
    // Predicated region
    $region22: #{encoder_forward.1} parent=1 // pred_check
      _
    $region23: #{encoder_forward.1} parent=1 // pred_check_branch
      %44 = sbr.rel (0) target = $region25
    $region24: #{encoder_forward.1} parent=1 // pred_region
      %45 = dma.done [#allocation6], 1024
    $region25: #{encoder_forward.1} parent=1 // pred_fallthru
      _
    %v46 = vld [vmem:[#allocation2] sm:$0xff]
    %v47 = vld [vmem:[#allocation2 + $0x8] sm:$0xff]
    %v48 = vld [vmem:[#allocation2 + $0x10] sm:$0xff]
    %v49 = vld [vmem:[#allocation2 + $0x18] sm:$0xff]
    %v50 = vld [vmem:[#allocation2 + $0x20] sm:$0xff]
    %v51 = vld [vmem:[#allocation2 + $0x28] sm:$0xff]
    %v52 = vld [vmem:[#allocation2 + $0x30] sm:$0xff]
    %v53 = vld [vmem:[#allocation2 + $0x38] sm:$0xff]
    %v54 = vld [vmem:[#allocation5] sm:$0xff]
    %v55 = vld [vmem:[#allocation5 + $0x10] sm:$0xff]
    %v56 = vld [vmem:[#allocation5 + $0x20] sm:$0xff]
    %v57 = vld [vmem:[#allocation5 + $0x30] sm:$0xff]
    %v58 = vld [vmem:[#allocation5 + $0x8] sm:$0xff]
    %v59 = vld [vmem:[#allocation5 + $0x18] sm:$0xff]
    %v60 = vld [vmem:[#allocation5 + $0x28] sm:$0xff]
    %v61 = vld [vmem:[#allocation5 + $0x38] sm:$0xff]
    %v62 = vld [vmem:[%s3] sm:$0x1]
    %v63 = vld [vmem:[%s3 + $0x1] sm:$0x1]
    %v64 = vld [vmem:[%s3 + $0x2] sm:$0x1]
    %v65 = vld [vmem:[%s3 + $0x3] sm:$0x1]
    %v66 = vld [vmem:[%s3 + $0x4] sm:$0xff]
    %v67 = vld [vmem:[%s0] sm:$0xff]
    %v68 = vld [vmem:[%s0 + $0x8] sm:$0xff]
    %v69 = vlaneseq
    %v70 = vand.u32 %v69, 127
    %71 = vset.pattern.permute.xlu0 0
    %72 = vperm.xlu0 %71, %v67
    %v73 = vpop.permute.xlu0 %72
    %74 = vset.pattern.permute.xlu0 0
    %75 = vperm.xlu0 %74, %v68
    %v76 = vpop.permute.xlu0 %75
    %vm77 = vcmp.eq.s32.totalorder %v70, %v73
    %vm78 = vcmp.eq.s32.totalorder %v70, %v76
    %v79 = vsel %vm77, 1, 0
    %v80 = vsel %vm78, 1, 0
    %v81 = vcvt.s32.f32 %v79
    %v82 = vcvt.s32.f32 %v80
    %vm83 = vcmask 523264
    %v85 = vsel %vm83, %v81, 0
    %v88 = vsel %vm83, %v82, 0
    %90 = vmatprep.subr.mxu0 0.0
    %91 = vmatpush1.msra.mxu0 %v46
    %92 = vmatprep.subr.mxu0 0.0
    %93 = vmatpush1.msra.mxu0 %v47
    %94 = vmatprep.subr.mxu0 0.0
    %95 = vmatpush1.msra.mxu0 %v48
    %96 = vmatprep.subr.mxu0 0.0
    %97 = vmatpush1.msra.mxu0 %v49
    %98 = vmatprep.subr.mxu0 0.0
    %99 = vmatpush1.msra.mxu0 %v50
    %100 = vmatprep.subr.mxu0 0.0
    %101 = vmatpush1.msra.mxu0 %v51
    %102 = vmatprep.subr.mxu0 0.0
    %103 = vmatpush1.msra.mxu0 %v52
    %104 = vmatprep.subr.mxu0 0.0
    %105 = vmatpush1.msra.mxu0 %v53
    %106 = vmatprep.subr.mxu0 0.0
    %107 = vmatpush1.msra.mxu0 0.0
    %108 = vmatprep.subr.mxu0 0.0
    %109 = vmatpush1.msra.mxu0 0.0
    %110 = vmatprep.subr.mxu0 0.0
    %111 = vmatpush1.msra.mxu0 0.0
    %112 = vmatprep.subr.mxu0 0.0
    %113 = vmatpush1.msra.mxu0 0.0
    %114 = vmatprep.subr.mxu0 0.0
    %115 = vmatpush1.msra.mxu0 0.0
    %116 = vmatprep.subr.mxu0 0.0
    %117 = vmatpush1.msra.mxu0 0.0
    %118 = vmatprep.subr.mxu0 0.0
    %119 = vmatpush1.msra.mxu0 0.0
    %120 = vmatprep.subr.mxu0 0.0
    %121 = vmatpush1.msra.mxu0 0.0
    %122 = vmatprep.subr.mxu0 0.0
    %123 = vmatpush1.msra.mxu0 0.0
    %124 = vmatprep.subr.mxu0 0.0
    %125 = vmatpush1.msra.mxu0 0.0
    %126 = vmatprep.subr.mxu0 0.0
    %127 = vmatpush1.msra.mxu0 0.0
    %128 = vmatprep.subr.mxu0 0.0
    %129 = vmatpush1.msra.mxu0 0.0
    %130 = vmatprep.subr.mxu0 0.0
    %131 = vmatpush1.msra.mxu0 0.0
    %132 = vmatprep.subr.mxu0 0.0
    %133 = vmatpush1.msra.mxu0 0.0
    %134 = vmatprep.subr.mxu0 0.0
    %135 = vmatpush1.msra.mxu0 0.0
    %136 = vmatprep.subr.mxu0 0.0
    %137 = vmatpush1.msra.mxu0 0.0
    %138 = vmatprep.subr.mxu0 0.0
    %139 = vmatpush1.msra.mxu0 0.0
    %140 = vmatprep.subr.mxu0 0.0
    %141 = vmatpush1.msra.mxu0 0.0
    %142 = vmatprep.subr.mxu0 0.0
    %143 = vmatpush1.msra.mxu0 0.0
    %144 = vmatprep.subr.mxu0 0.0
    %145 = vmatpush1.msra.mxu0 0.0
    %146 = vmatprep.subr.mxu0 0.0
    %147 = vmatpush1.msra.mxu0 0.0
    %148 = vmatprep.subr.mxu0 0.0
    %149 = vmatpush1.msra.mxu0 0.0
    %150 = vmatprep.subr.mxu0 0.0
    %151 = vmatpush1.msra.mxu0 0.0
    %152 = vmatprep.subr.mxu0 0.0
    %153 = vmatpush1.msra.mxu0 0.0
    %154 = vmatprep.mubr.f32.mxu0 0.0
    %155 = vmatmul.mubr.f32.gmra.mrb[0].mxu0 %v85
    %v156 = vpop.f32.mrb[0].mxu0
    %v157 = vadd.f32 %v66, %v156
    %v158 = vpop.f32.mrb[0].mxu0
    %159 = vmatprep.mubr.f32.mxu0 0.0
    %160 = vmatmul.mubr.f32.gmra.mrb[0].mxu0 %v88
    %v161 = vpop.f32.mrb[0].mxu0
    %v162 = vadd.f32 %v66, %v161
    %v163 = vpop.f32.mrb[0].mxu0
    %164 = vdwg.mxu0
    %v165 = vlaneseq
    %v166 = vshrl.u32 %v165, 7
    %v167 = vsub.s32 0, %v166
    %v168 = vrot.slane %v62, %v167
    %vm169 = vcmask 261120
    %v171 = vsel %vm169, %v157, 0
    %v174 = vsel %vm169, %v162, 0
    %176 = vmatprep.subr.mxu0 0.0
    %177 = vmatpush1.msra.mxu0 %v54
    %178 = vmatprep.subr.mxu0 0.0
    %179 = vmatpush1.msra.mxu0 %v55
    %180 = vmatprep.subr.mxu0 0.0
    %181 = vmatpush1.msra.mxu0 %v56
    %182 = vmatprep.subr.mxu0 0.0
    %183 = vmatpush1.msra.mxu0 %v57
    %184 = vmatprep.subr.mxu0 0.0
    %185 = vmatpush1.msra.mxu0 0.0
    %186 = vmatprep.subr.mxu0 0.0
    %187 = vmatpush1.msra.mxu0 0.0
    %188 = vmatprep.subr.mxu0 0.0
    %189 = vmatpush1.msra.mxu0 0.0
    %190 = vmatprep.subr.mxu0 0.0
    %191 = vmatpush1.msra.mxu0 0.0
    %192 = vmatprep.subr.mxu0 0.0
    %193 = vmatpush1.msra.mxu0 0.0
    %194 = vmatprep.subr.mxu0 0.0
    %195 = vmatpush1.msra.mxu0 0.0
    %196 = vmatprep.subr.mxu0 0.0
    %197 = vmatpush1.msra.mxu0 0.0
    %198 = vmatprep.subr.mxu0 0.0
    %199 = vmatpush1.msra.mxu0 0.0
    %200 = vmatprep.subr.mxu0 0.0
    %201 = vmatpush1.msra.mxu0 0.0
    %202 = vmatprep.subr.mxu0 0.0
    %203 = vmatpush1.msra.mxu0 0.0
    %204 = vmatprep.subr.mxu0 0.0
    %205 = vmatpush1.msra.mxu0 0.0
    %206 = vmatprep.subr.mxu0 0.0
    %207 = vmatpush1.msra.mxu0 0.0
    %208 = vmatprep.subr.mxu0 0.0
    %209 = vmatpush1.msra.mxu0 0.0
    %210 = vmatprep.subr.mxu0 0.0
    %211 = vmatpush1.msra.mxu0 0.0
    %212 = vmatprep.subr.mxu0 0.0
    %213 = vmatpush1.msra.mxu0 0.0
    %214 = vmatprep.subr.mxu0 0.0
    %215 = vmatpush1.msra.mxu0 0.0
    %216 = vmatprep.subr.mxu0 0.0
    %217 = vmatpush1.msra.mxu0 0.0
    %218 = vmatprep.subr.mxu0 0.0
    %219 = vmatpush1.msra.mxu0 0.0
    %220 = vmatprep.subr.mxu0 0.0
    %221 = vmatpush1.msra.mxu0 0.0
    %222 = vmatprep.subr.mxu0 0.0
    %223 = vmatpush1.msra.mxu0 0.0
    %224 = vmatprep.subr.mxu0 0.0
    %225 = vmatpush1.msra.mxu0 0.0
    %226 = vmatprep.subr.mxu0 0.0
    %227 = vmatpush1.msra.mxu0 0.0
    %228 = vmatprep.subr.mxu0 0.0
    %229 = vmatpush1.msra.mxu0 0.0
    %230 = vmatprep.subr.mxu0 0.0
    %231 = vmatpush1.msra.mxu0 0.0
    %232 = vmatprep.subr.mxu0 0.0
    %233 = vmatpush1.msra.mxu0 0.0
    %234 = vmatprep.subr.mxu0 0.0
    %235 = vmatpush1.msra.mxu0 0.0
    %236 = vmatprep.subr.mxu0 0.0
    %237 = vmatpush1.msra.mxu0 0.0
    %238 = vmatprep.subr.mxu0 0.0
    %239 = vmatpush1.msra.mxu0 0.0
    %240 = vmatprep.mubr.f32.mxu0 0.0
    %241 = vmatmul.mubr.f32.gmra.mrb[0].mxu0 %v171
    %v242 = vpop.f32.mrb[0].mxu0
    %v243 = vadd.f32 %v168, %v242
    %v244 = vpop.f32.mrb[0].mxu0
    %245 = vmatprep.mubr.f32.mxu0 0.0
    %246 = vmatmul.mubr.f32.gmra.mrb[0].mxu0 %v174
    %v247 = vpop.f32.mrb[0].mxu0
    %v248 = vadd.f32 %v168, %v247
    %v249 = vpop.f32.mrb[0].mxu0
    %250 = vdwg.mxu0
    %252 = vrot.lane.b32.xlu0 %v243, 96
    %v253 = vpop.permute.xlu0 %252
    %vm254 = vcmask 64512
    %v255 = vsel %vm254, %v243, 0
    %v257 = vsel %vm254, %v253, 0
    %259 = vmatprep.subr.mxu0 0.0
    %260 = vmatpush1.xpose.msra.mxu0 %v257
    %261 = vmatprep.subr.mxu0 0.0
    %262 = vmatpush1.xpose.msra.mxu0 0.0
    %263 = vmatprep.subr.mxu0 0.0
    %264 = vmatpush1.xpose.msra.mxu0 0.0
    %265 = vmatprep.subr.mxu0 0.0
    %266 = vmatpush1.xpose.msra.mxu0 0.0
    %267 = vmatprep.subr.mxu0 0.0
    %268 = vmatpush1.xpose.msra.mxu0 0.0
    %269 = vmatprep.subr.mxu0 0.0
    %270 = vmatpush1.xpose.msra.mxu0 0.0
    %271 = vmatprep.subr.mxu0 0.0
    %272 = vmatpush1.xpose.msra.mxu0 0.0
    %273 = vmatprep.subr.mxu0 0.0
    %274 = vmatpush1.xpose.msra.mxu0 0.0
    %275 = vmatprep.subr.mxu0 0.0
    %276 = vmatpush1.xpose.msra.mxu0 0.0
    %277 = vmatprep.subr.mxu0 0.0
    %278 = vmatpush1.xpose.msra.mxu0 0.0
    %279 = vmatprep.subr.mxu0 0.0
    %280 = vmatpush1.xpose.msra.mxu0 0.0
    %281 = vmatprep.subr.mxu0 0.0
    %282 = vmatpush1.xpose.msra.mxu0 0.0
    %283 = vmatprep.subr.mxu0 0.0
    %284 = vmatpush1.xpose.msra.mxu0 0.0
    %285 = vmatprep.subr.mxu0 0.0
    %286 = vmatpush1.xpose.msra.mxu0 0.0
    %287 = vmatprep.subr.mxu0 0.0
    %288 = vmatpush1.xpose.msra.mxu0 0.0
    %289 = vmatprep.subr.mxu0 0.0
    %290 = vmatpush1.xpose.msra.mxu0 0.0
    %291 = vmatprep.subr.mxu0 0.0
    %292 = vmatpush1.xpose.msra.mxu0 0.0
    %293 = vmatprep.subr.mxu0 0.0
    %294 = vmatpush1.xpose.msra.mxu0 0.0
    %295 = vmatprep.subr.mxu0 0.0
    %296 = vmatpush1.xpose.msra.mxu0 0.0
    %297 = vmatprep.subr.mxu0 0.0
    %298 = vmatpush1.xpose.msra.mxu0 0.0
    %299 = vmatprep.subr.mxu0 0.0
    %300 = vmatpush1.xpose.msra.mxu0 0.0
    %301 = vmatprep.subr.mxu0 0.0
    %302 = vmatpush1.xpose.msra.mxu0 0.0
    %303 = vmatprep.subr.mxu0 0.0
    %304 = vmatpush1.xpose.msra.mxu0 0.0
    %305 = vmatprep.subr.mxu0 0.0
    %306 = vmatpush1.xpose.msra.mxu0 0.0
    %307 = vmatprep.subr.mxu0 0.0
    %308 = vmatpush1.xpose.msra.mxu0 0.0
    %309 = vmatprep.subr.mxu0 0.0
    %310 = vmatpush1.xpose.msra.mxu0 0.0
    %311 = vmatprep.subr.mxu0 0.0
    %312 = vmatpush1.xpose.msra.mxu0 0.0
    %313 = vmatprep.subr.mxu0 0.0
    %314 = vmatpush1.xpose.msra.mxu0 0.0
    %315 = vmatprep.subr.mxu0 0.0
    %316 = vmatpush1.xpose.msra.mxu0 0.0
    %317 = vmatprep.subr.mxu0 0.0
    %318 = vmatpush1.xpose.msra.mxu0 0.0
    %319 = vmatprep.subr.mxu0 0.0
    %320 = vmatpush1.xpose.msra.mxu0 0.0
    %321 = vmatprep.subr.mxu0 0.0
    %322 = vmatpush1.xpose.msra.mxu0 0.0
    %323 = vmatprep.mubr.f32.mxu0 0.0
    %324 = vmatmul.mubr.f32.gmra.mrb[0].mxu0 %v255
    %v325 = vpop.f32.mrb[0].mxu0
    %v326 = vadd.f32 0.0, %v325
    %v327 = vpop.f32.mrb[0].mxu0
    %328 = vdwg.mxu0
    %330 = vrot.lane.b32.xlu0 %v248, 96
    %v331 = vpop.permute.xlu0 %330
    %v332 = vsel %vm254, %v248, 0
    %v334 = vsel %vm254, %v331, 0
    %336 = vmatprep.subr.mxu0 0.0
    %337 = vmatpush1.xpose.msra.mxu0 %v334
    %338 = vmatprep.subr.mxu0 0.0
    %339 = vmatpush1.xpose.msra.mxu0 0.0
    %340 = vmatprep.subr.mxu0 0.0
    %341 = vmatpush1.xpose.msra.mxu0 0.0
    %342 = vmatprep.subr.mxu0 0.0
    %343 = vmatpush1.xpose.msra.mxu0 0.0
    %344 = vmatprep.subr.mxu0 0.0
    %345 = vmatpush1.xpose.msra.mxu0 0.0
    %346 = vmatprep.subr.mxu0 0.0
    %347 = vmatpush1.xpose.msra.mxu0 0.0
    %348 = vmatprep.subr.mxu0 0.0
    %349 = vmatpush1.xpose.msra.mxu0 0.0
    %350 = vmatprep.subr.mxu0 0.0
    %351 = vmatpush1.xpose.msra.mxu0 0.0
    %352 = vmatprep.subr.mxu0 0.0
    %353 = vmatpush1.xpose.msra.mxu0 0.0
    %354 = vmatprep.subr.mxu0 0.0
    %355 = vmatpush1.xpose.msra.mxu0 0.0
    %356 = vmatprep.subr.mxu0 0.0
    %357 = vmatpush1.xpose.msra.mxu0 0.0
    %358 = vmatprep.subr.mxu0 0.0
    %359 = vmatpush1.xpose.msra.mxu0 0.0
    %360 = vmatprep.subr.mxu0 0.0
    %361 = vmatpush1.xpose.msra.mxu0 0.0
    %362 = vmatprep.subr.mxu0 0.0
    %363 = vmatpush1.xpose.msra.mxu0 0.0
    %364 = vmatprep.subr.mxu0 0.0
    %365 = vmatpush1.xpose.msra.mxu0 0.0
    %366 = vmatprep.subr.mxu0 0.0
    %367 = vmatpush1.xpose.msra.mxu0 0.0
    %368 = vmatprep.subr.mxu0 0.0
    %369 = vmatpush1.xpose.msra.mxu0 0.0
    %370 = vmatprep.subr.mxu0 0.0
    %371 = vmatpush1.xpose.msra.mxu0 0.0
    %372 = vmatprep.subr.mxu0 0.0
    %373 = vmatpush1.xpose.msra.mxu0 0.0
    %374 = vmatprep.subr.mxu0 0.0
    %375 = vmatpush1.xpose.msra.mxu0 0.0
    %376 = vmatprep.subr.mxu0 0.0
    %377 = vmatpush1.xpose.msra.mxu0 0.0
    %378 = vmatprep.subr.mxu0 0.0
    %379 = vmatpush1.xpose.msra.mxu0 0.0
    %380 = vmatprep.subr.mxu0 0.0
    %381 = vmatpush1.xpose.msra.mxu0 0.0
    %382 = vmatprep.subr.mxu0 0.0
    %383 = vmatpush1.xpose.msra.mxu0 0.0
    %384 = vmatprep.subr.mxu0 0.0
    %385 = vmatpush1.xpose.msra.mxu0 0.0
    %386 = vmatprep.subr.mxu0 0.0
    %387 = vmatpush1.xpose.msra.mxu0 0.0
    %388 = vmatprep.subr.mxu0 0.0
    %389 = vmatpush1.xpose.msra.mxu0 0.0
    %390 = vmatprep.subr.mxu0 0.0
    %391 = vmatpush1.xpose.msra.mxu0 0.0
    %392 = vmatprep.subr.mxu0 0.0
    %393 = vmatpush1.xpose.msra.mxu0 0.0
    %394 = vmatprep.subr.mxu0 0.0
    %395 = vmatpush1.xpose.msra.mxu0 0.0
    %396 = vmatprep.subr.mxu0 0.0
    %397 = vmatpush1.xpose.msra.mxu0 0.0
    %398 = vmatprep.subr.mxu0 0.0
    %399 = vmatpush1.xpose.msra.mxu0 0.0
    %400 = vmatprep.mubr.f32.mxu0 0.0
    %401 = vmatmul.mubr.f32.gmra.mrb[0].mxu0 %v332
    %v402 = vpop.f32.mrb[0].mxu0
    %v403 = vadd.f32 0.0, %v402
    %v404 = vpop.f32.mrb[0].mxu0
    %405 = vdwg.mxu0
    %v406 = vmul.f32 %v326, 0.35355338
    %v407 = vmul.f32 %v403, 0.35355338
    %v408 = vsel %vm254, %v406, -inf
    %409 = vmax.xlane.f32.xlu0 %v408
    %v410 = vpop.xlane.xlu0 %409
    %v411 = vsel %vm254, %v407, -inf
    %412 = vmax.xlane.f32.xlu0 %v411
    %v413 = vpop.xlane.xlu0 %412
    %v414 = vsub.f32 %v406, %v410
    %v415 = vsub.f32 %v407, %v413
    %v416 = vmul.f32 %v414, 1.442695
    %v417 = vpow.pop %v416
    %v418 = vmul.f32 %v415, 1.442695
    %v419 = vpow.pop %v418
    %v420 = vsel %vm254, %v417, 0.0
    %421 = vadd.xlane.f32.xlu0 %v420
    %v422 = vpop.xlane.xlu0 %421
    %v423 = vsel %vm254, %v419, 0.0
    %424 = vadd.xlane.f32.xlu0 %v423
    %v425 = vpop.xlane.xlu0 %424
    %v426 = vrcp.pop %v422
    %v427 = vrcp.pop %v425
    %v428 = vmul.f32 %v417, %v426
    %v429 = vmul.f32 %v419, %v427
    %430 = vrot.lane.b32.xlu0 %v243, 64
    %v431 = vpop.permute.xlu0 %430
    %v434 = vsel %vm254, %v428, 0
    %436 = vmatprep.subr.mxu0 0.0
    %437 = vmatpush1.msra.mxu0 %v431
    %438 = vmatprep.subr.mxu0 0.0
    %439 = vmatpush1.msra.mxu0 0.0
    %440 = vmatprep.subr.mxu0 0.0
    %441 = vmatpush1.msra.mxu0 0.0
    %442 = vmatprep.subr.mxu0 0.0
    %443 = vmatpush1.msra.mxu0 0.0
    %444 = vmatprep.subr.mxu0 0.0
    %445 = vmatpush1.msra.mxu0 0.0
    %446 = vmatprep.subr.mxu0 0.0
    %447 = vmatpush1.msra.mxu0 0.0
    %448 = vmatprep.subr.mxu0 0.0
    %449 = vmatpush1.msra.mxu0 0.0
    %450 = vmatprep.subr.mxu0 0.0
    %451 = vmatpush1.msra.mxu0 0.0
    %452 = vmatprep.subr.mxu0 0.0
    %453 = vmatpush1.msra.mxu0 0.0
    %454 = vmatprep.subr.mxu0 0.0
    %455 = vmatpush1.msra.mxu0 0.0
    %456 = vmatprep.subr.mxu0 0.0
    %457 = vmatpush1.msra.mxu0 0.0
    %458 = vmatprep.subr.mxu0 0.0
    %459 = vmatpush1.msra.mxu0 0.0
    %460 = vmatprep.subr.mxu0 0.0
    %461 = vmatpush1.msra.mxu0 0.0
    %462 = vmatprep.subr.mxu0 0.0
    %463 = vmatpush1.msra.mxu0 0.0
    %464 = vmatprep.subr.mxu0 0.0
    %465 = vmatpush1.msra.mxu0 0.0
    %466 = vmatprep.subr.mxu0 0.0
    %467 = vmatpush1.msra.mxu0 0.0
    %468 = vmatprep.subr.mxu0 0.0
    %469 = vmatpush1.msra.mxu0 0.0
    %470 = vmatprep.subr.mxu0 0.0
    %471 = vmatpush1.msra.mxu0 0.0
    %472 = vmatprep.subr.mxu0 0.0
    %473 = vmatpush1.msra.mxu0 0.0
    %474 = vmatprep.subr.mxu0 0.0
    %475 = vmatpush1.msra.mxu0 0.0
    %476 = vmatprep.subr.mxu0 0.0
    %477 = vmatpush1.msra.mxu0 0.0
    %478 = vmatprep.subr.mxu0 0.0
    %479 = vmatpush1.msra.mxu0 0.0
    %480 = vmatprep.subr.mxu0 0.0
    %481 = vmatpush1.msra.mxu0 0.0
    %482 = vmatprep.subr.mxu0 0.0
    %483 = vmatpush1.msra.mxu0 0.0
    %484 = vmatprep.subr.mxu0 0.0
    %485 = vmatpush1.msra.mxu0 0.0
    %486 = vmatprep.subr.mxu0 0.0
    %487 = vmatpush1.msra.mxu0 0.0
    %488 = vmatprep.subr.mxu0 0.0
    %489 = vmatpush1.msra.mxu0 0.0
    %490 = vmatprep.subr.mxu0 0.0
    %491 = vmatpush1.msra.mxu0 0.0
    %492 = vmatprep.subr.mxu0 0.0
    %493 = vmatpush1.msra.mxu0 0.0
    %494 = vmatprep.subr.mxu0 0.0
    %495 = vmatpush1.msra.mxu0 0.0
    %496 = vmatprep.subr.mxu0 0.0
    %497 = vmatpush1.msra.mxu0 0.0
    %498 = vmatprep.subr.mxu0 0.0
    %499 = vmatpush1.msra.mxu0 0.0
    %500 = vmatprep.mubr.f32.mxu0 0.0
    %501 = vmatmul.mubr.f32.gmra.mrb[0].mxu0 %v434
    %v502 = vpop.f32.mrb[0].mxu0
    %v503 = vadd.f32 0.0, %v502
    %v504 = vpop.f32.mrb[0].mxu0
    %505 = vdwg.mxu0
    %506 = vrot.lane.b32.xlu0 %v248, 64
    %v507 = vpop.permute.xlu0 %506
    %v510 = vsel %vm254, %v429, 0
    %512 = vmatprep.subr.mxu0 0.0
    %513 = vmatpush1.msra.mxu0 %v507
    %514 = vmatprep.subr.mxu0 0.0
    %515 = vmatpush1.msra.mxu0 0.0
    %516 = vmatprep.subr.mxu0 0.0
    %517 = vmatpush1.msra.mxu0 0.0
    %518 = vmatprep.subr.mxu0 0.0
    %519 = vmatpush1.msra.mxu0 0.0
    %520 = vmatprep.subr.mxu0 0.0
    %521 = vmatpush1.msra.mxu0 0.0
    %522 = vmatprep.subr.mxu0 0.0
    %523 = vmatpush1.msra.mxu0 0.0
    %524 = vmatprep.subr.mxu0 0.0
    %525 = vmatpush1.msra.mxu0 0.0
    %526 = vmatprep.subr.mxu0 0.0
    %527 = vmatpush1.msra.mxu0 0.0
    %528 = vmatprep.subr.mxu0 0.0
    %529 = vmatpush1.msra.mxu0 0.0
    %530 = vmatprep.subr.mxu0 0.0
    %531 = vmatpush1.msra.mxu0 0.0
    %532 = vmatprep.subr.mxu0 0.0
    %533 = vmatpush1.msra.mxu0 0.0
    %534 = vmatprep.subr.mxu0 0.0
    %535 = vmatpush1.msra.mxu0 0.0
    %536 = vmatprep.subr.mxu0 0.0
    %537 = vmatpush1.msra.mxu0 0.0
    %538 = vmatprep.subr.mxu0 0.0
    %539 = vmatpush1.msra.mxu0 0.0
    %540 = vmatprep.subr.mxu0 0.0
    %541 = vmatpush1.msra.mxu0 0.0
    %542 = vmatprep.subr.mxu0 0.0
    %543 = vmatpush1.msra.mxu0 0.0
    %544 = vmatprep.subr.mxu0 0.0
    %545 = vmatpush1.msra.mxu0 0.0
    %546 = vmatprep.subr.mxu0 0.0
    %547 = vmatpush1.msra.mxu0 0.0
    %548 = vmatprep.subr.mxu0 0.0
    %549 = vmatpush1.msra.mxu0 0.0
    %550 = vmatprep.subr.mxu0 0.0
    %551 = vmatpush1.msra.mxu0 0.0
    %552 = vmatprep.subr.mxu0 0.0
    %553 = vmatpush1.msra.mxu0 0.0
    %554 = vmatprep.subr.mxu0 0.0
    %555 = vmatpush1.msra.mxu0 0.0
    %556 = vmatprep.subr.mxu0 0.0
    %557 = vmatpush1.msra.mxu0 0.0
    %558 = vmatprep.subr.mxu0 0.0
    %559 = vmatpush1.msra.mxu0 0.0
    %560 = vmatprep.subr.mxu0 0.0
    %561 = vmatpush1.msra.mxu0 0.0
    %562 = vmatprep.subr.mxu0 0.0
    %563 = vmatpush1.msra.mxu0 0.0
    %564 = vmatprep.subr.mxu0 0.0
    %565 = vmatpush1.msra.mxu0 0.0
    %566 = vmatprep.subr.mxu0 0.0
    %567 = vmatpush1.msra.mxu0 0.0
    %568 = vmatprep.subr.mxu0 0.0
    %569 = vmatpush1.msra.mxu0 0.0
    %570 = vmatprep.subr.mxu0 0.0
    %571 = vmatpush1.msra.mxu0 0.0
    %572 = vmatprep.subr.mxu0 0.0
    %573 = vmatpush1.msra.mxu0 0.0
    %574 = vmatprep.subr.mxu0 0.0
    %575 = vmatpush1.msra.mxu0 0.0
    %576 = vmatprep.mubr.f32.mxu0 0.0
    %577 = vmatmul.mubr.f32.gmra.mrb[0].mxu0 %v510
    %v578 = vpop.f32.mrb[0].mxu0
    %v579 = vadd.f32 0.0, %v578
    %v580 = vpop.f32.mrb[0].mxu0
    %581 = vdwg.mxu0
    %582 = vrot.lane.b32.xlu0 %v243, 120
    %v583 = vpop.permute.xlu0 %582
    %584 = vrot.lane.b32.xlu0 %v243, 88
    %v585 = vpop.permute.xlu0 %584
    %v586 = vsel %vm254, %v583, 0
    %v588 = vsel %vm254, %v585, 0
    %590 = vmatprep.subr.mxu0 0.0
    %591 = vmatpush1.xpose.msra.mxu0 %v588
    %592 = vmatprep.subr.mxu0 0.0
    %593 = vmatpush1.xpose.msra.mxu0 0.0
    %594 = vmatprep.subr.mxu0 0.0
    %595 = vmatpush1.xpose.msra.mxu0 0.0
    %596 = vmatprep.subr.mxu0 0.0
    %597 = vmatpush1.xpose.msra.mxu0 0.0
    %598 = vmatprep.subr.mxu0 0.0
    %599 = vmatpush1.xpose.msra.mxu0 0.0
    %600 = vmatprep.subr.mxu0 0.0
    %601 = vmatpush1.xpose.msra.mxu0 0.0
    %602 = vmatprep.subr.mxu0 0.0
    %603 = vmatpush1.xpose.msra.mxu0 0.0
    %604 = vmatprep.subr.mxu0 0.0
    %605 = vmatpush1.xpose.msra.mxu0 0.0
    %606 = vmatprep.subr.mxu0 0.0
    %607 = vmatpush1.xpose.msra.mxu0 0.0
    %608 = vmatprep.subr.mxu0 0.0
    %609 = vmatpush1.xpose.msra.mxu0 0.0
    %610 = vmatprep.subr.mxu0 0.0
    %611 = vmatpush1.xpose.msra.mxu0 0.0
    %612 = vmatprep.subr.mxu0 0.0
    %613 = vmatpush1.xpose.msra.mxu0 0.0
    %614 = vmatprep.subr.mxu0 0.0
    %615 = vmatpush1.xpose.msra.mxu0 0.0
    %616 = vmatprep.subr.mxu0 0.0
    %617 = vmatpush1.xpose.msra.mxu0 0.0
    %618 = vmatprep.subr.mxu0 0.0
    %619 = vmatpush1.xpose.msra.mxu0 0.0
    %620 = vmatprep.subr.mxu0 0.0
    %621 = vmatpush1.xpose.msra.mxu0 0.0
    %622 = vmatprep.subr.mxu0 0.0
    %623 = vmatpush1.xpose.msra.mxu0 0.0
    %624 = vmatprep.subr.mxu0 0.0
    %625 = vmatpush1.xpose.msra.mxu0 0.0
    %626 = vmatprep.subr.mxu0 0.0
    %627 = vmatpush1.xpose.msra.mxu0 0.0
    %628 = vmatprep.subr.mxu0 0.0
    %629 = vmatpush1.xpose.msra.mxu0 0.0
    %630 = vmatprep.subr.mxu0 0.0
    %631 = vmatpush1.xpose.msra.mxu0 0.0
    %632 = vmatprep.subr.mxu0 0.0
    %633 = vmatpush1.xpose.msra.mxu0 0.0
    %634 = vmatprep.subr.mxu0 0.0
    %635 = vmatpush1.xpose.msra.mxu0 0.0
    %636 = vmatprep.subr.mxu0 0.0
    %637 = vmatpush1.xpose.msra.mxu0 0.0
    %638 = vmatprep.subr.mxu0 0.0
    %639 = vmatpush1.xpose.msra.mxu0 0.0
    %640 = vmatprep.subr.mxu0 0.0
    %641 = vmatpush1.xpose.msra.mxu0 0.0
    %642 = vmatprep.subr.mxu0 0.0
    %643 = vmatpush1.xpose.msra.mxu0 0.0
    %644 = vmatprep.subr.mxu0 0.0
    %645 = vmatpush1.xpose.msra.mxu0 0.0
    %646 = vmatprep.subr.mxu0 0.0
    %647 = vmatpush1.xpose.msra.mxu0 0.0
    %648 = vmatprep.subr.mxu0 0.0
    %649 = vmatpush1.xpose.msra.mxu0 0.0
    %650 = vmatprep.subr.mxu0 0.0
    %651 = vmatpush1.xpose.msra.mxu0 0.0
    %652 = vmatprep.subr.mxu0 0.0
    %653 = vmatpush1.xpose.msra.mxu0 0.0
    %654 = vmatprep.mubr.f32.mxu0 0.0
    %655 = vmatmul.mubr.f32.gmra.mrb[0].mxu0 %v586
    %v656 = vpop.f32.mrb[0].mxu0
    %v657 = vadd.f32 0.0, %v656
    %v658 = vpop.f32.mrb[0].mxu0
    %659 = vdwg.mxu0
    %660 = vrot.lane.b32.xlu0 %v248, 120
    %v661 = vpop.permute.xlu0 %660
    %662 = vrot.lane.b32.xlu0 %v248, 88
    %v663 = vpop.permute.xlu0 %662
    %v664 = vsel %vm254, %v661, 0
    %v666 = vsel %vm254, %v663, 0
    %668 = vmatprep.subr.mxu0 0.0
    %669 = vmatpush1.xpose.msra.mxu0 %v666
    %670 = vmatprep.subr.mxu0 0.0
    %671 = vmatpush1.xpose.msra.mxu0 0.0
    %672 = vmatprep.subr.mxu0 0.0
    %673 = vmatpush1.xpose.msra.mxu0 0.0
    %674 = vmatprep.subr.mxu0 0.0
    %675 = vmatpush1.xpose.msra.mxu0 0.0
    %676 = vmatprep.subr.mxu0 0.0
    %677 = vmatpush1.xpose.msra.mxu0 0.0
    %678 = vmatprep.subr.mxu0 0.0
    %679 = vmatpush1.xpose.msra.mxu0 0.0
    %680 = vmatprep.subr.mxu0 0.0
    %681 = vmatpush1.xpose.msra.mxu0 0.0
    %682 = vmatprep.subr.mxu0 0.0
    %683 = vmatpush1.xpose.msra.mxu0 0.0
    %684 = vmatprep.subr.mxu0 0.0
    %685 = vmatpush1.xpose.msra.mxu0 0.0
    %686 = vmatprep.subr.mxu0 0.0
    %687 = vmatpush1.xpose.msra.mxu0 0.0
    %688 = vmatprep.subr.mxu0 0.0
    %689 = vmatpush1.xpose.msra.mxu0 0.0
    %690 = vmatprep.subr.mxu0 0.0
    %691 = vmatpush1.xpose.msra.mxu0 0.0
    %692 = vmatprep.subr.mxu0 0.0
    %693 = vmatpush1.xpose.msra.mxu0 0.0
    %694 = vmatprep.subr.mxu0 0.0
    %695 = vmatpush1.xpose.msra.mxu0 0.0
    %696 = vmatprep.subr.mxu0 0.0
    %697 = vmatpush1.xpose.msra.mxu0 0.0
    %698 = vmatprep.subr.mxu0 0.0
    %699 = vmatpush1.xpose.msra.mxu0 0.0
    %700 = vmatprep.subr.mxu0 0.0
    %701 = vmatpush1.xpose.msra.mxu0 0.0
    %702 = vmatprep.subr.mxu0 0.0
    %703 = vmatpush1.xpose.msra.mxu0 0.0
    %704 = vmatprep.subr.mxu0 0.0
    %705 = vmatpush1.xpose.msra.mxu0 0.0
    %706 = vmatprep.subr.mxu0 0.0
    %707 = vmatpush1.xpose.msra.mxu0 0.0
    %708 = vmatprep.subr.mxu0 0.0
    %709 = vmatpush1.xpose.msra.mxu0 0.0
    %710 = vmatprep.subr.mxu0 0.0
    %711 = vmatpush1.xpose.msra.mxu0 0.0
    %712 = vmatprep.subr.mxu0 0.0
    %713 = vmatpush1.xpose.msra.mxu0 0.0
    %714 = vmatprep.subr.mxu0 0.0
    %715 = vmatpush1.xpose.msra.mxu0 0.0
    %716 = vmatprep.subr.mxu0 0.0
    %717 = vmatpush1.xpose.msra.mxu0 0.0
    %718 = vmatprep.subr.mxu0 0.0
    %719 = vmatpush1.xpose.msra.mxu0 0.0
    %720 = vmatprep.subr.mxu0 0.0
    %721 = vmatpush1.xpose.msra.mxu0 0.0
    %722 = vmatprep.subr.mxu0 0.0
    %723 = vmatpush1.xpose.msra.mxu0 0.0
    %724 = vmatprep.subr.mxu0 0.0
    %725 = vmatpush1.xpose.msra.mxu0 0.0
    %726 = vmatprep.subr.mxu0 0.0
    %727 = vmatpush1.xpose.msra.mxu0 0.0
    %728 = vmatprep.subr.mxu0 0.0
    %729 = vmatpush1.xpose.msra.mxu0 0.0
    %730 = vmatprep.subr.mxu0 0.0
    %731 = vmatpush1.xpose.msra.mxu0 0.0
    %732 = vmatprep.mubr.f32.mxu0 0.0
    %733 = vmatmul.mubr.f32.gmra.mrb[0].mxu0 %v664
    %v734 = vpop.f32.mrb[0].mxu0
    %v735 = vadd.f32 0.0, %v734
    %v736 = vpop.f32.mrb[0].mxu0
    %737 = vdwg.mxu0
    %v738 = vmul.f32 %v657, 0.35355338
    %v739 = vmul.f32 %v735, 0.35355338
    %v740 = vsel %vm254, %v738, -inf
    %741 = vmax.xlane.f32.xlu0 %v740
    %v742 = vpop.xlane.xlu0 %741
    %v743 = vsel %vm254, %v739, -inf
    %744 = vmax.xlane.f32.xlu0 %v743
    %v745 = vpop.xlane.xlu0 %744
    %v746 = vsub.f32 %v738, %v742
    %v747 = vsub.f32 %v739, %v745
    %v748 = vmul.f32 %v746, 1.442695
    %v749 = vpow.pop %v748
    %v750 = vmul.f32 %v747, 1.442695
    %v751 = vpow.pop %v750
    %v752 = vsel %vm254, %v749, 0.0
    %753 = vadd.xlane.f32.xlu0 %v752
    %v754 = vpop.xlane.xlu0 %753
    %v755 = vsel %vm254, %v751, 0.0
    %756 = vadd.xlane.f32.xlu0 %v755
    %v757 = vpop.xlane.xlu0 %756
    %v758 = vrcp.pop %v754
    %v759 = vrcp.pop %v757
    %v760 = vmul.f32 %v749, %v758
    %v761 = vmul.f32 %v751, %v759
    %762 = vrot.lane.b32.xlu0 %v243, 56
    %v763 = vpop.permute.xlu0 %762
    %v766 = vsel %vm254, %v760, 0
    %768 = vmatprep.subr.mxu0 0.0
    %769 = vmatpush1.msra.mxu0 %v763
    %770 = vmatprep.subr.mxu0 0.0
    %771 = vmatpush1.msra.mxu0 0.0
    %772 = vmatprep.subr.mxu0 0.0
    %773 = vmatpush1.msra.mxu0 0.0
    %774 = vmatprep.subr.mxu0 0.0
    %775 = vmatpush1.msra.mxu0 0.0
    %776 = vmatprep.subr.mxu0 0.0
    %777 = vmatpush1.msra.mxu0 0.0
    %778 = vmatprep.subr.mxu0 0.0
    %779 = vmatpush1.msra.mxu0 0.0
    %780 = vmatprep.subr.mxu0 0.0
    %781 = vmatpush1.msra.mxu0 0.0
    %782 = vmatprep.subr.mxu0 0.0
    %783 = vmatpush1.msra.mxu0 0.0
    %784 = vmatprep.subr.mxu0 0.0
    %785 = vmatpush1.msra.mxu0 0.0
    %786 = vmatprep.subr.mxu0 0.0
    %787 = vmatpush1.msra.mxu0 0.0
    %788 = vmatprep.subr.mxu0 0.0
    %789 = vmatpush1.msra.mxu0 0.0
    %790 = vmatprep.subr.mxu0 0.0
    %791 = vmatpush1.msra.mxu0 0.0
    %792 = vmatprep.subr.mxu0 0.0
    %793 = vmatpush1.msra.mxu0 0.0
    %794 = vmatprep.subr.mxu0 0.0
    %795 = vmatpush1.msra.mxu0 0.0
    %796 = vmatprep.subr.mxu0 0.0
    %797 = vmatpush1.msra.mxu0 0.0
    %798 = vmatprep.subr.mxu0 0.0
    %799 = vmatpush1.msra.mxu0 0.0
    %800 = vmatprep.subr.mxu0 0.0
    %801 = vmatpush1.msra.mxu0 0.0
    %802 = vmatprep.subr.mxu0 0.0
    %803 = vmatpush1.msra.mxu0 0.0
    %804 = vmatprep.subr.mxu0 0.0
    %805 = vmatpush1.msra.mxu0 0.0
    %806 = vmatprep.subr.mxu0 0.0
    %807 = vmatpush1.msra.mxu0 0.0
    %808 = vmatprep.subr.mxu0 0.0
    %809 = vmatpush1.msra.mxu0 0.0
    %810 = vmatprep.subr.mxu0 0.0
    %811 = vmatpush1.msra.mxu0 0.0
    %812 = vmatprep.subr.mxu0 0.0
    %813 = vmatpush1.msra.mxu0 0.0
    %814 = vmatprep.subr.mxu0 0.0
    %815 = vmatpush1.msra.mxu0 0.0
    %816 = vmatprep.subr.mxu0 0.0
    %817 = vmatpush1.msra.mxu0 0.0
    %818 = vmatprep.subr.mxu0 0.0
    %819 = vmatpush1.msra.mxu0 0.0
    %820 = vmatprep.subr.mxu0 0.0
    %821 = vmatpush1.msra.mxu0 0.0
    %822 = vmatprep.subr.mxu0 0.0
    %823 = vmatpush1.msra.mxu0 0.0
    %824 = vmatprep.subr.mxu0 0.0
    %825 = vmatpush1.msra.mxu0 0.0
    %826 = vmatprep.subr.mxu0 0.0
    %827 = vmatpush1.msra.mxu0 0.0
    %828 = vmatprep.subr.mxu0 0.0
    %829 = vmatpush1.msra.mxu0 0.0
    %830 = vmatprep.subr.mxu0 0.0
    %831 = vmatpush1.msra.mxu0 0.0
    %832 = vmatprep.mubr.f32.mxu0 0.0
    %833 = vmatmul.mubr.f32.gmra.mrb[0].mxu0 %v766
    %v834 = vpop.f32.mrb[0].mxu0
    %v835 = vadd.f32 0.0, %v834
    %v836 = vpop.f32.mrb[0].mxu0
    %837 = vdwg.mxu0
    %838 = vrot.lane.b32.xlu0 %v248, 56
    %v839 = vpop.permute.xlu0 %838
    %v842 = vsel %vm254, %v761, 0
    %844 = vmatprep.subr.mxu0 0.0
    %845 = vmatpush1.msra.mxu0 %v839
    %846 = vmatprep.subr.mxu0 0.0
    %847 = vmatpush1.msra.mxu0 0.0
    %848 = vmatprep.subr.mxu0 0.0
    %849 = vmatpush1.msra.mxu0 0.0
    %850 = vmatprep.subr.mxu0 0.0
    %851 = vmatpush1.msra.mxu0 0.0
    %852 = vmatprep.subr.mxu0 0.0
    %853 = vmatpush1.msra.mxu0 0.0
    %854 = vmatprep.subr.mxu0 0.0
    %855 = vmatpush1.msra.mxu0 0.0
    %856 = vmatprep.subr.mxu0 0.0
    %857 = vmatpush1.msra.mxu0 0.0
    %858 = vmatprep.subr.mxu0 0.0
    %859 = vmatpush1.msra.mxu0 0.0
    %860 = vmatprep.subr.mxu0 0.0
    %861 = vmatpush1.msra.mxu0 0.0
    %862 = vmatprep.subr.mxu0 0.0
    %863 = vmatpush1.msra.mxu0 0.0
    %864 = vmatprep.subr.mxu0 0.0
    %865 = vmatpush1.msra.mxu0 0.0
    %866 = vmatprep.subr.mxu0 0.0
    %867 = vmatpush1.msra.mxu0 0.0
    %868 = vmatprep.subr.mxu0 0.0
    %869 = vmatpush1.msra.mxu0 0.0
    %870 = vmatprep.subr.mxu0 0.0
    %871 = vmatpush1.msra.mxu0 0.0
    %872 = vmatprep.subr.mxu0 0.0
    %873 = vmatpush1.msra.mxu0 0.0
    %874 = vmatprep.subr.mxu0 0.0
    %875 = vmatpush1.msra.mxu0 0.0
    %876 = vmatprep.subr.mxu0 0.0
    %877 = vmatpush1.msra.mxu0 0.0
    %878 = vmatprep.subr.mxu0 0.0
    %879 = vmatpush1.msra.mxu0 0.0
    %880 = vmatprep.subr.mxu0 0.0
    %881 = vmatpush1.msra.mxu0 0.0
    %882 = vmatprep.subr.mxu0 0.0
    %883 = vmatpush1.msra.mxu0 0.0
    %884 = vmatprep.subr.mxu0 0.0
    %885 = vmatpush1.msra.mxu0 0.0
    %886 = vmatprep.subr.mxu0 0.0
    %887 = vmatpush1.msra.mxu0 0.0
    %888 = vmatprep.subr.mxu0 0.0
    %889 = vmatpush1.msra.mxu0 0.0
    %890 = vmatprep.subr.mxu0 0.0
    %891 = vmatpush1.msra.mxu0 0.0
    %892 = vmatprep.subr.mxu0 0.0
    %893 = vmatpush1.msra.mxu0 0.0
    %894 = vmatprep.subr.mxu0 0.0
    %895 = vmatpush1.msra.mxu0 0.0
    %896 = vmatprep.subr.mxu0 0.0
    %897 = vmatpush1.msra.mxu0 0.0
    %898 = vmatprep.subr.mxu0 0.0
    %899 = vmatpush1.msra.mxu0 0.0
    %900 = vmatprep.subr.mxu0 0.0
    %901 = vmatpush1.msra.mxu0 0.0
    %902 = vmatprep.subr.mxu0 0.0
    %903 = vmatpush1.msra.mxu0 0.0
    %904 = vmatprep.subr.mxu0 0.0
    %905 = vmatpush1.msra.mxu0 0.0
    %906 = vmatprep.subr.mxu0 0.0
    %907 = vmatpush1.msra.mxu0 0.0
    %908 = vmatprep.mubr.f32.mxu0 0.0
    %909 = vmatmul.mubr.f32.gmra.mrb[0].mxu0 %v842
    %v910 = vpop.f32.mrb[0].mxu0
    %v911 = vadd.f32 0.0, %v910
    %v912 = vpop.f32.mrb[0].mxu0
    %913 = vdwg.mxu0
    %914 = vrot.lane.b32.xlu0 %v243, 112
    %v915 = vpop.permute.xlu0 %914
    %916 = vrot.lane.b32.xlu0 %v243, 80
    %v917 = vpop.permute.xlu0 %916
    %v918 = vsel %vm254, %v915, 0
    %v920 = vsel %vm254, %v917, 0
    %922 = vmatprep.subr.mxu0 0.0
    %923 = vmatpush1.xpose.msra.mxu0 %v920
    %924 = vmatprep.subr.mxu0 0.0
    %925 = vmatpush1.xpose.msra.mxu0 0.0
    %926 = vmatprep.subr.mxu0 0.0
    %927 = vmatpush1.xpose.msra.mxu0 0.0
    %928 = vmatprep.subr.mxu0 0.0
    %929 = vmatpush1.xpose.msra.mxu0 0.0
    %930 = vmatprep.subr.mxu0 0.0
    %931 = vmatpush1.xpose.msra.mxu0 0.0
    %932 = vmatprep.subr.mxu0 0.0
    %933 = vmatpush1.xpose.msra.mxu0 0.0
    %934 = vmatprep.subr.mxu0 0.0
    %935 = vmatpush1.xpose.msra.mxu0 0.0
    %936 = vmatprep.subr.mxu0 0.0
    %937 = vmatpush1.xpose.msra.mxu0 0.0
    %938 = vmatprep.subr.mxu0 0.0
    %939 = vmatpush1.xpose.msra.mxu0 0.0
    %940 = vmatprep.subr.mxu0 0.0
    %941 = vmatpush1.xpose.msra.mxu0 0.0
    %942 = vmatprep.subr.mxu0 0.0
    %943 = vmatpush1.xpose.msra.mxu0 0.0
    %944 = vmatprep.subr.mxu0 0.0
    %945 = vmatpush1.xpose.msra.mxu0 0.0
    %946 = vmatprep.subr.mxu0 0.0
    %947 = vmatpush1.xpose.msra.mxu0 0.0
    %948 = vmatprep.subr.mxu0 0.0
    %949 = vmatpush1.xpose.msra.mxu0 0.0
    %950 = vmatprep.subr.mxu0 0.0
    %951 = vmatpush1.xpose.msra.mxu0 0.0
    %952 = vmatprep.subr.mxu0 0.0
    %953 = vmatpush1.xpose.msra.mxu0 0.0
    %954 = vmatprep.subr.mxu0 0.0
    %955 = vmatpush1.xpose.msra.mxu0 0.0
    %956 = vmatprep.subr.mxu0 0.0
    %957 = vmatpush1.xpose.msra.mxu0 0.0
    %958 = vmatprep.subr.mxu0 0.0
    %959 = vmatpush1.xpose.msra.mxu0 0.0
    %960 = vmatprep.subr.mxu0 0.0
    %961 = vmatpush1.xpose.msra.mxu0 0.0
    %962 = vmatprep.subr.mxu0 0.0
    %963 = vmatpush1.xpose.msra.mxu0 0.0
    %964 = vmatprep.subr.mxu0 0.0
    %965 = vmatpush1.xpose.msra.mxu0 0.0
    %966 = vmatprep.subr.mxu0 0.0
    %967 = vmatpush1.xpose.msra.mxu0 0.0
    %968 = vmatprep.subr.mxu0 0.0
    %969 = vmatpush1.xpose.msra.mxu0 0.0
    %970 = vmatprep.subr.mxu0 0.0
    %971 = vmatpush1.xpose.msra.mxu0 0.0
    %972 = vmatprep.subr.mxu0 0.0
    %973 = vmatpush1.xpose.msra.mxu0 0.0
    %974 = vmatprep.subr.mxu0 0.0
    %975 = vmatpush1.xpose.msra.mxu0 0.0
    %976 = vmatprep.subr.mxu0 0.0
    %977 = vmatpush1.xpose.msra.mxu0 0.0
    %978 = vmatprep.subr.mxu0 0.0
    %979 = vmatpush1.xpose.msra.mxu0 0.0
    %980 = vmatprep.subr.mxu0 0.0
    %981 = vmatpush1.xpose.msra.mxu0 0.0
    %982 = vmatprep.subr.mxu0 0.0
    %983 = vmatpush1.xpose.msra.mxu0 0.0
    %984 = vmatprep.subr.mxu0 0.0
    %985 = vmatpush1.xpose.msra.mxu0 0.0
    %986 = vmatprep.mubr.f32.mxu0 0.0
    %987 = vmatmul.mubr.f32.gmra.mrb[0].mxu0 %v918
    %v988 = vpop.f32.mrb[0].mxu0
    %v989 = vadd.f32 0.0, %v988
    %v990 = vpop.f32.mrb[0].mxu0
    %991 = vdwg.mxu0
    %992 = vrot.lane.b32.xlu0 %v248, 112
    %v993 = vpop.permute.xlu0 %992
    %994 = vrot.lane.b32.xlu0 %v248, 80
    %v995 = vpop.permute.xlu0 %994
    %v996 = vsel %vm254, %v993, 0
    %v998 = vsel %vm254, %v995, 0
    %1000 = vmatprep.subr.mxu0 0.0
    %1001 = vmatpush1.xpose.msra.mxu0 %v998
    %1002 = vmatprep.subr.mxu0 0.0
    %1003 = vmatpush1.xpose.msra.mxu0 0.0
    %1004 = vmatprep.subr.mxu0 0.0
    %1005 = vmatpush1.xpose.msra.mxu0 0.0
    %1006 = vmatprep.subr.mxu0 0.0
    %1007 = vmatpush1.xpose.msra.mxu0 0.0
    %1008 = vmatprep.subr.mxu0 0.0
    %1009 = vmatpush1.xpose.msra.mxu0 0.0
    %1010 = vmatprep.subr.mxu0 0.0
    %1011 = vmatpush1.xpose.msra.mxu0 0.0
    %1012 = vmatprep.subr.mxu0 0.0
    %1013 = vmatpush1.xpose.msra.mxu0 0.0
    %1014 = vmatprep.subr.mxu0 0.0
    %1015 = vmatpush1.xpose.msra.mxu0 0.0
    %1016 = vmatprep.subr.mxu0 0.0
    %1017 = vmatpush1.xpose.msra.mxu0 0.0
    %1018 = vmatprep.subr.mxu0 0.0
    %1019 = vmatpush1.xpose.msra.mxu0 0.0
    %1020 = vmatprep.subr.mxu0 0.0
    %1021 = vmatpush1.xpose.msra.mxu0 0.0
    %1022 = vmatprep.subr.mxu0 0.0
    %1023 = vmatpush1.xpose.msra.mxu0 0.0
    %1024 = vmatprep.subr.mxu0 0.0
    %1025 = vmatpush1.xpose.msra.mxu0 0.0
    %1026 = vmatprep.subr.mxu0 0.0
    %1027 = vmatpush1.xpose.msra.mxu0 0.0
    %1028 = vmatprep.subr.mxu0 0.0
    %1029 = vmatpush1.xpose.msra.mxu0 0.0
    %1030 = vmatprep.subr.mxu0 0.0
    %1031 = vmatpush1.xpose.msra.mxu0 0.0
    %1032 = vmatprep.subr.mxu0 0.0
    %1033 = vmatpush1.xpose.msra.mxu0 0.0
    %1034 = vmatprep.subr.mxu0 0.0
    %1035 = vmatpush1.xpose.msra.mxu0 0.0
    %1036 = vmatprep.subr.mxu0 0.0
    %1037 = vmatpush1.xpose.msra.mxu0 0.0
    %1038 = vmatprep.subr.mxu0 0.0
    %1039 = vmatpush1.xpose.msra.mxu0 0.0
    %1040 = vmatprep.subr.mxu0 0.0
    %1041 = vmatpush1.xpose.msra.mxu0 0.0
    %1042 = vmatprep.subr.mxu0 0.0
    %1043 = vmatpush1.xpose.msra.mxu0 0.0
    %1044 = vmatprep.subr.mxu0 0.0
    %1045 = vmatpush1.xpose.msra.mxu0 0.0
    %1046 = vmatprep.subr.mxu0 0.0
    %1047 = vmatpush1.xpose.msra.mxu0 0.0
    %1048 = vmatprep.subr.mxu0 0.0
    %1049 = vmatpush1.xpose.msra.mxu0 0.0
    %1050 = vmatprep.subr.mxu0 0.0
    %1051 = vmatpush1.xpose.msra.mxu0 0.0
    %1052 = vmatprep.subr.mxu0 0.0
    %1053 = vmatpush1.xpose.msra.mxu0 0.0
    %1054 = vmatprep.subr.mxu0 0.0
    %1055 = vmatpush1.xpose.msra.mxu0 0.0
    %1056 = vmatprep.subr.mxu0 0.0
    %1057 = vmatpush1.xpose.msra.mxu0 0.0
    %1058 = vmatprep.subr.mxu0 0.0
    %1059 = vmatpush1.xpose.msra.mxu0 0.0
    %1060 = vmatprep.subr.mxu0 0.0
    %1061 = vmatpush1.xpose.msra.mxu0 0.0
    %1062 = vmatprep.subr.mxu0 0.0
    %1063 = vmatpush1.xpose.msra.mxu0 0.0
    %1064 = vmatprep.mubr.f32.mxu0 0.0
    %1065 = vmatmul.mubr.f32.gmra.mrb[0].mxu0 %v996
    %v1066 = vpop.f32.mrb[0].mxu0
    %v1067 = vadd.f32 0.0, %v1066
    %v1068 = vpop.f32.mrb[0].mxu0
    %1069 = vdwg.mxu0
    %v1070 = vmul.f32 %v989, 0.35355338
    %v1071 = vmul.f32 %v1067, 0.35355338
    %v1072 = vsel %vm254, %v1070, -inf
    %1073 = vmax.xlane.f32.xlu0 %v1072
    %v1074 = vpop.xlane.xlu0 %1073
    %v1075 = vsel %vm254, %v1071, -inf
    %1076 = vmax.xlane.f32.xlu0 %v1075
    %v1077 = vpop.xlane.xlu0 %1076
    %v1078 = vsub.f32 %v1070, %v1074
    %v1079 = vsub.f32 %v1071, %v1077
    %v1080 = vmul.f32 %v1078, 1.442695
    %v1081 = vpow.pop %v1080
    %v1082 = vmul.f32 %v1079, 1.442695
    %v1083 = vpow.pop %v1082
    %v1084 = vsel %vm254, %v1081, 0.0
    %1085 = vadd.xlane.f32.xlu0 %v1084
    %v1086 = vpop.xlane.xlu0 %1085
    %v1087 = vsel %vm254, %v1083, 0.0
    %1088 = vadd.xlane.f32.xlu0 %v1087
    %v1089 = vpop.xlane.xlu0 %1088
    %v1090 = vrcp.pop %v1086
    %v1091 = vrcp.pop %v1089
    %v1092 = vmul.f32 %v1081, %v1090
    %v1093 = vmul.f32 %v1083, %v1091
    %1094 = vrot.lane.b32.xlu0 %v243, 48
    %v1095 = vpop.permute.xlu0 %1094
    %v1098 = vsel %vm254, %v1092, 0
    %1100 = vmatprep.subr.mxu0 0.0
    %1101 = vmatpush1.msra.mxu0 %v1095
    %1102 = vmatprep.subr.mxu0 0.0
    %1103 = vmatpush1.msra.mxu0 0.0
    %1104 = vmatprep.subr.mxu0 0.0
    %1105 = vmatpush1.msra.mxu0 0.0
    %1106 = vmatprep.subr.mxu0 0.0
    %1107 = vmatpush1.msra.mxu0 0.0
    %1108 = vmatprep.subr.mxu0 0.0
    %1109 = vmatpush1.msra.mxu0 0.0
    %1110 = vmatprep.subr.mxu0 0.0
    %1111 = vmatpush1.msra.mxu0 0.0
    %1112 = vmatprep.subr.mxu0 0.0
    %1113 = vmatpush1.msra.mxu0 0.0
    %1114 = vmatprep.subr.mxu0 0.0
    %1115 = vmatpush1.msra.mxu0 0.0
    %1116 = vmatprep.subr.mxu0 0.0
    %1117 = vmatpush1.msra.mxu0 0.0
    %1118 = vmatprep.subr.mxu0 0.0
    %1119 = vmatpush1.msra.mxu0 0.0
    %1120 = vmatprep.subr.mxu0 0.0
    %1121 = vmatpush1.msra.mxu0 0.0
    %1122 = vmatprep.subr.mxu0 0.0
    %1123 = vmatpush1.msra.mxu0 0.0
    %1124 = vmatprep.subr.mxu0 0.0
    %1125 = vmatpush1.msra.mxu0 0.0
    %1126 = vmatprep.subr.mxu0 0.0
    %1127 = vmatpush1.msra.mxu0 0.0
    %1128 = vmatprep.subr.mxu0 0.0
    %1129 = vmatpush1.msra.mxu0 0.0
    %1130 = vmatprep.subr.mxu0 0.0
    %1131 = vmatpush1.msra.mxu0 0.0
    %1132 = vmatprep.subr.mxu0 0.0
    %1133 = vmatpush1.msra.mxu0 0.0
    %1134 = vmatprep.subr.mxu0 0.0
    %1135 = vmatpush1.msra.mxu0 0.0
    %1136 = vmatprep.subr.mxu0 0.0
    %1137 = vmatpush1.msra.mxu0 0.0
    %1138 = vmatprep.subr.mxu0 0.0
    %1139 = vmatpush1.msra.mxu0 0.0
    %1140 = vmatprep.subr.mxu0 0.0
    %1141 = vmatpush1.msra.mxu0 0.0
    %1142 = vmatprep.subr.mxu0 0.0
    %1143 = vmatpush1.msra.mxu0 0.0
    %1144 = vmatprep.subr.mxu0 0.0
    %1145 = vmatpush1.msra.mxu0 0.0
    %1146 = vmatprep.subr.mxu0 0.0
    %1147 = vmatpush1.msra.mxu0 0.0
    %1148 = vmatprep.subr.mxu0 0.0
    %1149 = vmatpush1.msra.mxu0 0.0
    %1150 = vmatprep.subr.mxu0 0.0
    %1151 = vmatpush1.msra.mxu0 0.0
    %1152 = vmatprep.subr.mxu0 0.0
    %1153 = vmatpush1.msra.mxu0 0.0
    %1154 = vmatprep.subr.mxu0 0.0
    %1155 = vmatpush1.msra.mxu0 0.0
    %1156 = vmatprep.subr.mxu0 0.0
    %1157 = vmatpush1.msra.mxu0 0.0
    %1158 = vmatprep.subr.mxu0 0.0
    %1159 = vmatpush1.msra.mxu0 0.0
    %1160 = vmatprep.subr.mxu0 0.0
    %1161 = vmatpush1.msra.mxu0 0.0
    %1162 = vmatprep.subr.mxu0 0.0
    %1163 = vmatpush1.msra.mxu0 0.0
    %1164 = vmatprep.mubr.f32.mxu0 0.0
    %1165 = vmatmul.mubr.f32.gmra.mrb[0].mxu0 %v1098
    %v1166 = vpop.f32.mrb[0].mxu0
    %v1167 = vadd.f32 0.0, %v1166
    %v1168 = vpop.f32.mrb[0].mxu0
    %1169 = vdwg.mxu0
    %1170 = vrot.lane.b32.xlu0 %v248, 48
    %v1171 = vpop.permute.xlu0 %1170
    %v1174 = vsel %vm254, %v1093, 0
    %1176 = vmatprep.subr.mxu0 0.0
    %1177 = vmatpush1.msra.mxu0 %v1171
    %1178 = vmatprep.subr.mxu0 0.0
    %1179 = vmatpush1.msra.mxu0 0.0
    %1180 = vmatprep.subr.mxu0 0.0
    %1181 = vmatpush1.msra.mxu0 0.0
    %1182 = vmatprep.subr.mxu0 0.0
    %1183 = vmatpush1.msra.mxu0 0.0
    %1184 = vmatprep.subr.mxu0 0.0
    %1185 = vmatpush1.msra.mxu0 0.0
    %1186 = vmatprep.subr.mxu0 0.0
    %1187 = vmatpush1.msra.mxu0 0.0
    %1188 = vmatprep.subr.mxu0 0.0
    %1189 = vmatpush1.msra.mxu0 0.0
    %1190 = vmatprep.subr.mxu0 0.0
    %1191 = vmatpush1.msra.mxu0 0.0
    %1192 = vmatprep.subr.mxu0 0.0
    %1193 = vmatpush1.msra.mxu0 0.0
    %1194 = vmatprep.subr.mxu0 0.0
    %1195 = vmatpush1.msra.mxu0 0.0
    %1196 = vmatprep.subr.mxu0 0.0
    %1197 = vmatpush1.msra.mxu0 0.0
    %1198 = vmatprep.subr.mxu0 0.0
    %1199 = vmatpush1.msra.mxu0 0.0
    %1200 = vmatprep.subr.mxu0 0.0
    %1201 = vmatpush1.msra.mxu0 0.0
    %1202 = vmatprep.subr.mxu0 0.0
    %1203 = vmatpush1.msra.mxu0 0.0
    %1204 = vmatprep.subr.mxu0 0.0
    %1205 = vmatpush1.msra.mxu0 0.0
    %1206 = vmatprep.subr.mxu0 0.0
    %1207 = vmatpush1.msra.mxu0 0.0
    %1208 = vmatprep.subr.mxu0 0.0
    %1209 = vmatpush1.msra.mxu0 0.0
    %1210 = vmatprep.subr.mxu0 0.0
    %1211 = vmatpush1.msra.mxu0 0.0
    %1212 = vmatprep.subr.mxu0 0.0
    %1213 = vmatpush1.msra.mxu0 0.0
    %1214 = vmatprep.subr.mxu0 0.0
    %1215 = vmatpush1.msra.mxu0 0.0
    %1216 = vmatprep.subr.mxu0 0.0
    %1217 = vmatpush1.msra.mxu0 0.0
    %1218 = vmatprep.subr.mxu0 0.0
    %1219 = vmatpush1.msra.mxu0 0.0
    %1220 = vmatprep.subr.mxu0 0.0
    %1221 = vmatpush1.msra.mxu0 0.0
    %1222 = vmatprep.subr.mxu0 0.0
    %1223 = vmatpush1.msra.mxu0 0.0
    %1224 = vmatprep.subr.mxu0 0.0
    %1225 = vmatpush1.msra.mxu0 0.0
    %1226 = vmatprep.subr.mxu0 0.0
    %1227 = vmatpush1.msra.mxu0 0.0
    %1228 = vmatprep.subr.mxu0 0.0
    %1229 = vmatpush1.msra.mxu0 0.0
    %1230 = vmatprep.subr.mxu0 0.0
    %1231 = vmatpush1.msra.mxu0 0.0
    %1232 = vmatprep.subr.mxu0 0.0
    %1233 = vmatpush1.msra.mxu0 0.0
    %1234 = vmatprep.subr.mxu0 0.0
    %1235 = vmatpush1.msra.mxu0 0.0
    %1236 = vmatprep.subr.mxu0 0.0
    %1237 = vmatpush1.msra.mxu0 0.0
    %1238 = vmatprep.subr.mxu0 0.0
    %1239 = vmatpush1.msra.mxu0 0.0
    %1240 = vmatprep.mubr.f32.mxu0 0.0
    %1241 = vmatmul.mubr.f32.gmra.mrb[0].mxu0 %v1174
    %v1242 = vpop.f32.mrb[0].mxu0
    %v1243 = vadd.f32 0.0, %v1242
    %v1244 = vpop.f32.mrb[0].mxu0
    %1245 = vdwg.mxu0
    %1246 = vrot.lane.b32.xlu0 %v243, 104
    %v1247 = vpop.permute.xlu0 %1246
    %1248 = vrot.lane.b32.xlu0 %v243, 72
    %v1249 = vpop.permute.xlu0 %1248
    %v1250 = vsel %vm254, %v1247, 0
    %v1252 = vsel %vm254, %v1249, 0
    %1254 = vmatprep.subr.mxu0 0.0
    %1255 = vmatpush1.xpose.msra.mxu0 %v1252
    %1256 = vmatprep.subr.mxu0 0.0
    %1257 = vmatpush1.xpose.msra.mxu0 0.0
    %1258 = vmatprep.subr.mxu0 0.0
    %1259 = vmatpush1.xpose.msra.mxu0 0.0
    %1260 = vmatprep.subr.mxu0 0.0
    %1261 = vmatpush1.xpose.msra.mxu0 0.0
    %1262 = vmatprep.subr.mxu0 0.0
    %1263 = vmatpush1.xpose.msra.mxu0 0.0
    %1264 = vmatprep.subr.mxu0 0.0
    %1265 = vmatpush1.xpose.msra.mxu0 0.0
    %1266 = vmatprep.subr.mxu0 0.0
    %1267 = vmatpush1.xpose.msra.mxu0 0.0
    %1268 = vmatprep.subr.mxu0 0.0
    %1269 = vmatpush1.xpose.msra.mxu0 0.0
    %1270 = vmatprep.subr.mxu0 0.0
    %1271 = vmatpush1.xpose.msra.mxu0 0.0
    %1272 = vmatprep.subr.mxu0 0.0
    %1273 = vmatpush1.xpose.msra.mxu0 0.0
    %1274 = vmatprep.subr.mxu0 0.0
    %1275 = vmatpush1.xpose.msra.mxu0 0.0
    %1276 = vmatprep.subr.mxu0 0.0
    %1277 = vmatpush1.xpose.msra.mxu0 0.0
    %1278 = vmatprep.subr.mxu0 0.0
    %1279 = vmatpush1.xpose.msra.mxu0 0.0
    %1280 = vmatprep.subr.mxu0 0.0
    %1281 = vmatpush1.xpose.msra.mxu0 0.0
    %1282 = vmatprep.subr.mxu0 0.0
    %1283 = vmatpush1.xpose.msra.mxu0 0.0
    %1284 = vmatprep.subr.mxu0 0.0
    %1285 = vmatpush1.xpose.msra.mxu0 0.0
    %1286 = vmatprep.subr.mxu0 0.0
    %1287 = vmatpush1.xpose.msra.mxu0 0.0
    %1288 = vmatprep.subr.mxu0 0.0
    %1289 = vmatpush1.xpose.msra.mxu0 0.0
    %1290 = vmatprep.subr.mxu0 0.0
    %1291 = vmatpush1.xpose.msra.mxu0 0.0
    %1292 = vmatprep.subr.mxu0 0.0
    %1293 = vmatpush1.xpose.msra.mxu0 0.0
    %1294 = vmatprep.subr.mxu0 0.0
    %1295 = vmatpush1.xpose.msra.mxu0 0.0
    %1296 = vmatprep.subr.mxu0 0.0
    %1297 = vmatpush1.xpose.msra.mxu0 0.0
    %1298 = vmatprep.subr.mxu0 0.0
    %1299 = vmatpush1.xpose.msra.mxu0 0.0
    %1300 = vmatprep.subr.mxu0 0.0
    %1301 = vmatpush1.xpose.msra.mxu0 0.0
    %1302 = vmatprep.subr.mxu0 0.0
    %1303 = vmatpush1.xpose.msra.mxu0 0.0
    %1304 = vmatprep.subr.mxu0 0.0
    %1305 = vmatpush1.xpose.msra.mxu0 0.0
    %1306 = vmatprep.subr.mxu0 0.0
    %1307 = vmatpush1.xpose.msra.mxu0 0.0
    %1308 = vmatprep.subr.mxu0 0.0
    %1309 = vmatpush1.xpose.msra.mxu0 0.0
    %1310 = vmatprep.subr.mxu0 0.0
    %1311 = vmatpush1.xpose.msra.mxu0 0.0
    %1312 = vmatprep.subr.mxu0 0.0
    %1313 = vmatpush1.xpose.msra.mxu0 0.0
    %1314 = vmatprep.subr.mxu0 0.0
    %1315 = vmatpush1.xpose.msra.mxu0 0.0
    %1316 = vmatprep.subr.mxu0 0.0
    %1317 = vmatpush1.xpose.msra.mxu0 0.0
    %1318 = vmatprep.mubr.f32.mxu0 0.0
    %1319 = vmatmul.mubr.f32.gmra.mrb[0].mxu0 %v1250
    %v1320 = vpop.f32.mrb[0].mxu0
    %v1321 = vadd.f32 0.0, %v1320
    %v1322 = vpop.f32.mrb[0].mxu0
    %1323 = vdwg.mxu0
    %1324 = vrot.lane.b32.xlu0 %v248, 104
    %v1325 = vpop.permute.xlu0 %1324
    %1326 = vrot.lane.b32.xlu0 %v248, 72
    %v1327 = vpop.permute.xlu0 %1326
    %v1328 = vsel %vm254, %v1325, 0
    %v1330 = vsel %vm254, %v1327, 0
    %1332 = vmatprep.subr.mxu0 0.0
    %1333 = vmatpush1.xpose.msra.mxu0 %v1330
    %1334 = vmatprep.subr.mxu0 0.0
    %1335 = vmatpush1.xpose.msra.mxu0 0.0
    %1336 = vmatprep.subr.mxu0 0.0
    %1337 = vmatpush1.xpose.msra.mxu0 0.0
    %1338 = vmatprep.subr.mxu0 0.0
    %1339 = vmatpush1.xpose.msra.mxu0 0.0
    %1340 = vmatprep.subr.mxu0 0.0
    %1341 = vmatpush1.xpose.msra.mxu0 0.0
    %1342 = vmatprep.subr.mxu0 0.0
    %1343 = vmatpush1.xpose.msra.mxu0 0.0
    %1344 = vmatprep.subr.mxu0 0.0
    %1345 = vmatpush1.xpose.msra.mxu0 0.0
    %1346 = vmatprep.subr.mxu0 0.0
    %1347 = vmatpush1.xpose.msra.mxu0 0.0
    %1348 = vmatprep.subr.mxu0 0.0
    %1349 = vmatpush1.xpose.msra.mxu0 0.0
    %1350 = vmatprep.subr.mxu0 0.0
    %1351 = vmatpush1.xpose.msra.mxu0 0.0
    %1352 = vmatprep.subr.mxu0 0.0
    %1353 = vmatpush1.xpose.msra.mxu0 0.0
    %1354 = vmatprep.subr.mxu0 0.0
    %1355 = vmatpush1.xpose.msra.mxu0 0.0
    %1356 = vmatprep.subr.mxu0 0.0
    %1357 = vmatpush1.xpose.msra.mxu0 0.0
    %1358 = vmatprep.subr.mxu0 0.0
    %1359 = vmatpush1.xpose.msra.mxu0 0.0
    %1360 = vmatprep.subr.mxu0 0.0
    %1361 = vmatpush1.xpose.msra.mxu0 0.0
    %1362 = vmatprep.subr.mxu0 0.0
    %1363 = vmatpush1.xpose.msra.mxu0 0.0
    %1364 = vmatprep.subr.mxu0 0.0
    %1365 = vmatpush1.xpose.msra.mxu0 0.0
    %1366 = vmatprep.subr.mxu0 0.0
    %1367 = vmatpush1.xpose.msra.mxu0 0.0
    %1368 = vmatprep.subr.mxu0 0.0
    %1369 = vmatpush1.xpose.msra.mxu0 0.0
    %1370 = vmatprep.subr.mxu0 0.0
    %1371 = vmatpush1.xpose.msra.mxu0 0.0
    %1372 = vmatprep.subr.mxu0 0.0
    %1373 = vmatpush1.xpose.msra.mxu0 0.0
    %1374 = vmatprep.subr.mxu0 0.0
    %1375 = vmatpush1.xpose.msra.mxu0 0.0
    %1376 = vmatprep.subr.mxu0 0.0
    %1377 = vmatpush1.xpose.msra.mxu0 0.0
    %1378 = vmatprep.subr.mxu0 0.0
    %1379 = vmatpush1.xpose.msra.mxu0 0.0
    %1380 = vmatprep.subr.mxu0 0.0
    %1381 = vmatpush1.xpose.msra.mxu0 0.0
    %1382 = vmatprep.subr.mxu0 0.0
    %1383 = vmatpush1.xpose.msra.mxu0 0.0
    %1384 = vmatprep.subr.mxu0 0.0
    %1385 = vmatpush1.xpose.msra.mxu0 0.0
    %1386 = vmatprep.subr.mxu0 0.0
    %1387 = vmatpush1.xpose.msra.mxu0 0.0
    %1388 = vmatprep.subr.mxu0 0.0
    %1389 = vmatpush1.xpose.msra.mxu0 0.0
    %1390 = vmatprep.subr.mxu0 0.0
    %1391 = vmatpush1.xpose.msra.mxu0 0.0
    %1392 = vmatprep.subr.mxu0 0.0
    %1393 = vmatpush1.xpose.msra.mxu0 0.0
    %1394 = vmatprep.subr.mxu0 0.0
    %1395 = vmatpush1.xpose.msra.mxu0 0.0
    %1396 = vmatprep.mubr.f32.mxu0 0.0
    %1397 = vmatmul.mubr.f32.gmra.mrb[0].mxu0 %v1328
    %v1398 = vpop.f32.mrb[0].mxu0
    %v1399 = vadd.f32 0.0, %v1398
    %v1400 = vpop.f32.mrb[0].mxu0
    %1401 = vdwg.mxu0
    %v1402 = vmul.f32 %v1321, 0.35355338
    %v1403 = vmul.f32 %v1399, 0.35355338
    %v1404 = vsel %vm254, %v1402, -inf
    %1405 = vmax.xlane.f32.xlu0 %v1404
    %v1406 = vpop.xlane.xlu0 %1405
    %v1407 = vsel %vm254, %v1403, -inf
    %1408 = vmax.xlane.f32.xlu0 %v1407
    %v1409 = vpop.xlane.xlu0 %1408
    %v1410 = vsub.f32 %v1402, %v1406
    %v1411 = vsub.f32 %v1403, %v1409
    %v1412 = vmul.f32 %v1410, 1.442695
    %v1413 = vpow.pop %v1412
    %v1414 = vmul.f32 %v1411, 1.442695
    %v1415 = vpow.pop %v1414
    %v1416 = vsel %vm254, %v1413, 0.0
    %1417 = vadd.xlane.f32.xlu0 %v1416
    %v1418 = vpop.xlane.xlu0 %1417
    %v1419 = vsel %vm254, %v1415, 0.0
    %1420 = vadd.xlane.f32.xlu0 %v1419
    %v1421 = vpop.xlane.xlu0 %1420
    %v1422 = vrcp.pop %v1418
    %v1423 = vrcp.pop %v1421
    %v1424 = vmul.f32 %v1413, %v1422
    %v1425 = vmul.f32 %v1415, %v1423
    %1426 = vrot.lane.b32.xlu0 %v243, 40
    %v1427 = vpop.permute.xlu0 %1426
    %v1430 = vsel %vm254, %v1424, 0
    %1432 = vmatprep.subr.mxu0 0.0
    %1433 = vmatpush1.msra.mxu0 %v1427
    %1434 = vmatprep.subr.mxu0 0.0
    %1435 = vmatpush1.msra.mxu0 0.0
    %1436 = vmatprep.subr.mxu0 0.0
    %1437 = vmatpush1.msra.mxu0 0.0
    %1438 = vmatprep.subr.mxu0 0.0
    %1439 = vmatpush1.msra.mxu0 0.0
    %1440 = vmatprep.subr.mxu0 0.0
    %1441 = vmatpush1.msra.mxu0 0.0
    %1442 = vmatprep.subr.mxu0 0.0
    %1443 = vmatpush1.msra.mxu0 0.0
    %1444 = vmatprep.subr.mxu0 0.0
    %1445 = vmatpush1.msra.mxu0 0.0
    %1446 = vmatprep.subr.mxu0 0.0
    %1447 = vmatpush1.msra.mxu0 0.0
    %1448 = vmatprep.subr.mxu0 0.0
    %1449 = vmatpush1.msra.mxu0 0.0
    %1450 = vmatprep.subr.mxu0 0.0
    %1451 = vmatpush1.msra.mxu0 0.0
    %1452 = vmatprep.subr.mxu0 0.0
    %1453 = vmatpush1.msra.mxu0 0.0
    %1454 = vmatprep.subr.mxu0 0.0
    %1455 = vmatpush1.msra.mxu0 0.0
    %1456 = vmatprep.subr.mxu0 0.0
    %1457 = vmatpush1.msra.mxu0 0.0
    %1458 = vmatprep.subr.mxu0 0.0
    %1459 = vmatpush1.msra.mxu0 0.0
    %1460 = vmatprep.subr.mxu0 0.0
    %1461 = vmatpush1.msra.mxu0 0.0
    %1462 = vmatprep.subr.mxu0 0.0
    %1463 = vmatpush1.msra.mxu0 0.0
    %1464 = vmatprep.subr.mxu0 0.0
    %1465 = vmatpush1.msra.mxu0 0.0
    %1466 = vmatprep.subr.mxu0 0.0
    %1467 = vmatpush1.msra.mxu0 0.0
    %1468 = vmatprep.subr.mxu0 0.0
    %1469 = vmatpush1.msra.mxu0 0.0
    %1470 = vmatprep.subr.mxu0 0.0
    %1471 = vmatpush1.msra.mxu0 0.0
    %1472 = vmatprep.subr.mxu0 0.0
    %1473 = vmatpush1.msra.mxu0 0.0
    %1474 = vmatprep.subr.mxu0 0.0
    %1475 = vmatpush1.msra.mxu0 0.0
    %1476 = vmatprep.subr.mxu0 0.0
    %1477 = vmatpush1.msra.mxu0 0.0
    %1478 = vmatprep.subr.mxu0 0.0
    %1479 = vmatpush1.msra.mxu0 0.0
    %1480 = vmatprep.subr.mxu0 0.0
    %1481 = vmatpush1.msra.mxu0 0.0
    %1482 = vmatprep.subr.mxu0 0.0
    %1483 = vmatpush1.msra.mxu0 0.0
    %1484 = vmatprep.subr.mxu0 0.0
    %1485 = vmatpush1.msra.mxu0 0.0
    %1486 = vmatprep.subr.mxu0 0.0
    %1487 = vmatpush1.msra.mxu0 0.0
    %1488 = vmatprep.subr.mxu0 0.0
    %1489 = vmatpush1.msra.mxu0 0.0
    %1490 = vmatprep.subr.mxu0 0.0
    %1491 = vmatpush1.msra.mxu0 0.0
    %1492 = vmatprep.subr.mxu0 0.0
    %1493 = vmatpush1.msra.mxu0 0.0
    %1494 = vmatprep.subr.mxu0 0.0
    %1495 = vmatpush1.msra.mxu0 0.0
    %1496 = vmatprep.mubr.f32.mxu0 0.0
    %1497 = vmatmul.mubr.f32.gmra.mrb[0].mxu0 %v1430
    %v1498 = vpop.f32.mrb[0].mxu0
    %v1499 = vadd.f32 0.0, %v1498
    %v1500 = vpop.f32.mrb[0].mxu0
    %1501 = vdwg.mxu0
    %1502 = vrot.lane.b32.xlu0 %v248, 40
    %v1503 = vpop.permute.xlu0 %1502
    %v1506 = vsel %vm254, %v1425, 0
    %1508 = vmatprep.subr.mxu0 0.0
    %1509 = vmatpush1.msra.mxu0 %v1503
    %1510 = vmatprep.subr.mxu0 0.0
    %1511 = vmatpush1.msra.mxu0 0.0
    %1512 = vmatprep.subr.mxu0 0.0
    %1513 = vmatpush1.msra.mxu0 0.0
    %1514 = vmatprep.subr.mxu0 0.0
    %1515 = vmatpush1.msra.mxu0 0.0
    %1516 = vmatprep.subr.mxu0 0.0
    %1517 = vmatpush1.msra.mxu0 0.0
    %1518 = vmatprep.subr.mxu0 0.0
    %1519 = vmatpush1.msra.mxu0 0.0
    %1520 = vmatprep.subr.mxu0 0.0
    %1521 = vmatpush1.msra.mxu0 0.0
    %1522 = vmatprep.subr.mxu0 0.0
    %1523 = vmatpush1.msra.mxu0 0.0
    %1524 = vmatprep.subr.mxu0 0.0
    %1525 = vmatpush1.msra.mxu0 0.0
    %1526 = vmatprep.subr.mxu0 0.0
    %1527 = vmatpush1.msra.mxu0 0.0
    %1528 = vmatprep.subr.mxu0 0.0
    %1529 = vmatpush1.msra.mxu0 0.0
    %1530 = vmatprep.subr.mxu0 0.0
    %1531 = vmatpush1.msra.mxu0 0.0
    %1532 = vmatprep.subr.mxu0 0.0
    %1533 = vmatpush1.msra.mxu0 0.0
    %1534 = vmatprep.subr.mxu0 0.0
    %1535 = vmatpush1.msra.mxu0 0.0
    %1536 = vmatprep.subr.mxu0 0.0
    %1537 = vmatpush1.msra.mxu0 0.0
    %1538 = vmatprep.subr.mxu0 0.0
    %1539 = vmatpush1.msra.mxu0 0.0
    %1540 = vmatprep.subr.mxu0 0.0
    %1541 = vmatpush1.msra.mxu0 0.0
    %1542 = vmatprep.subr.mxu0 0.0
    %1543 = vmatpush1.msra.mxu0 0.0
    %1544 = vmatprep.subr.mxu0 0.0
    %1545 = vmatpush1.msra.mxu0 0.0
    %1546 = vmatprep.subr.mxu0 0.0
    %1547 = vmatpush1.msra.mxu0 0.0
    %1548 = vmatprep.subr.mxu0 0.0
    %1549 = vmatpush1.msra.mxu0 0.0
    %1550 = vmatprep.subr.mxu0 0.0
    %1551 = vmatpush1.msra.mxu0 0.0
    %1552 = vmatprep.subr.mxu0 0.0
    %1553 = vmatpush1.msra.mxu0 0.0
    %1554 = vmatprep.subr.mxu0 0.0
    %1555 = vmatpush1.msra.mxu0 0.0
    %1556 = vmatprep.subr.mxu0 0.0
    %1557 = vmatpush1.msra.mxu0 0.0
    %1558 = vmatprep.subr.mxu0 0.0
    %1559 = vmatpush1.msra.mxu0 0.0
    %1560 = vmatprep.subr.mxu0 0.0
    %1561 = vmatpush1.msra.mxu0 0.0
    %1562 = vmatprep.subr.mxu0 0.0
    %1563 = vmatpush1.msra.mxu0 0.0
    %1564 = vmatprep.subr.mxu0 0.0
    %1565 = vmatpush1.msra.mxu0 0.0
    %1566 = vmatprep.subr.mxu0 0.0
    %1567 = vmatpush1.msra.mxu0 0.0
    %1568 = vmatprep.subr.mxu0 0.0
    %1569 = vmatpush1.msra.mxu0 0.0
    %1570 = vmatprep.subr.mxu0 0.0
    %1571 = vmatpush1.msra.mxu0 0.0
    %1572 = vmatprep.mubr.f32.mxu0 0.0
    %1573 = vmatmul.mubr.f32.gmra.mrb[0].mxu0 %v1506
    %v1574 = vpop.f32.mrb[0].mxu0
    %v1575 = vadd.f32 0.0, %v1574
    %v1576 = vpop.f32.mrb[0].mxu0
    %1577 = vdwg.mxu0
    %1580 = vrot.lane.b32.xlu0 %v835, 8
    %v1581 = vpop.permute.xlu0 %1580
    %1582 = vrot.lane.b32.xlu0 %v911, 8
    %v1583 = vpop.permute.xlu0 %1582
    %1588 = vrot.lane.b32.xlu0 %v1167, 16
    %v1589 = vpop.permute.xlu0 %1588
    %1590 = vrot.lane.b32.xlu0 %v1243, 16
    %v1591 = vpop.permute.xlu0 %1590
    %1596 = vrot.lane.b32.xlu0 %v1499, 24
    %v1597 = vpop.permute.xlu0 %1596
    %1598 = vrot.lane.b32.xlu0 %v1575, 24
    %v1599 = vpop.permute.xlu0 %1598
    %v1602 = vsel %vm254, %v503, %v1581
    %v1603 = vsel %vm254, %v579, %v1583
    %vm1604 = vcmask 130048
    %v1605 = vsel %vm1604, %v1602, %v1589
    %v1606 = vsel %vm1604, %v1603, %v1591
    %vm1607 = vcmask 195584
    %v1608 = vsel %vm1607, %v1605, %v1597
    %v1609 = vsel %vm1607, %v1606, %v1599
    %v1610 = vlaneseq
    %v1611 = vshrl.u32 %v1610, 7
    %v1612 = vsub.s32 0, %v1611
    %v1613 = vrot.slane %v64, %v1612
    %1618 = vrot.lane.b32.xlu0 %v54, 32
    %v1619 = vpop.permute.xlu0 %1618
    %1620 = vrot.lane.b32.xlu0 %v55, 32
    %v1621 = vpop.permute.xlu0 %1620
    %1622 = vrot.lane.b32.xlu0 %v56, 32
    %v1623 = vpop.permute.xlu0 %1622
    %1624 = vrot.lane.b32.xlu0 %v57, 32
    %v1625 = vpop.permute.xlu0 %1624
    %v1631 = vsel %vm169, %v1608, 0
    %v1634 = vsel %vm169, %v1609, 0
    %1636 = vmatprep.subr.mxu0 0.0
    %1637 = vmatpush1.msra.mxu0 %v1619
    %1638 = vmatprep.subr.mxu0 0.0
    %1639 = vmatpush1.msra.mxu0 %v1621
    %1640 = vmatprep.subr.mxu0 0.0
    %1641 = vmatpush1.msra.mxu0 %v1623
    %1642 = vmatprep.subr.mxu0 0.0
    %1643 = vmatpush1.msra.mxu0 %v1625
    %1644 = vmatprep.subr.mxu0 0.0
    %1645 = vmatpush1.msra.mxu0 0.0
    %1646 = vmatprep.subr.mxu0 0.0
    %1647 = vmatpush1.msra.mxu0 0.0
    %1648 = vmatprep.subr.mxu0 0.0
    %1649 = vmatpush1.msra.mxu0 0.0
    %1650 = vmatprep.subr.mxu0 0.0
    %1651 = vmatpush1.msra.mxu0 0.0
    %1652 = vmatprep.subr.mxu0 0.0
    %1653 = vmatpush1.msra.mxu0 0.0
    %1654 = vmatprep.subr.mxu0 0.0
    %1655 = vmatpush1.msra.mxu0 0.0
    %1656 = vmatprep.subr.mxu0 0.0
    %1657 = vmatpush1.msra.mxu0 0.0
    %1658 = vmatprep.subr.mxu0 0.0
    %1659 = vmatpush1.msra.mxu0 0.0
    %1660 = vmatprep.subr.mxu0 0.0
    %1661 = vmatpush1.msra.mxu0 0.0
    %1662 = vmatprep.subr.mxu0 0.0
    %1663 = vmatpush1.msra.mxu0 0.0
    %1664 = vmatprep.subr.mxu0 0.0
    %1665 = vmatpush1.msra.mxu0 0.0
    %1666 = vmatprep.subr.mxu0 0.0
    %1667 = vmatpush1.msra.mxu0 0.0
    %1668 = vmatprep.subr.mxu0 0.0
    %1669 = vmatpush1.msra.mxu0 0.0
    %1670 = vmatprep.subr.mxu0 0.0
    %1671 = vmatpush1.msra.mxu0 0.0
    %1672 = vmatprep.subr.mxu0 0.0
    %1673 = vmatpush1.msra.mxu0 0.0
    %1674 = vmatprep.subr.mxu0 0.0
    %1675 = vmatpush1.msra.mxu0 0.0
    %1676 = vmatprep.subr.mxu0 0.0
    %1677 = vmatpush1.msra.mxu0 0.0
    %1678 = vmatprep.subr.mxu0 0.0
    %1679 = vmatpush1.msra.mxu0 0.0
    %1680 = vmatprep.subr.mxu0 0.0
    %1681 = vmatpush1.msra.mxu0 0.0
    %1682 = vmatprep.subr.mxu0 0.0
    %1683 = vmatpush1.msra.mxu0 0.0
    %1684 = vmatprep.subr.mxu0 0.0
    %1685 = vmatpush1.msra.mxu0 0.0
    %1686 = vmatprep.subr.mxu0 0.0
    %1687 = vmatpush1.msra.mxu0 0.0
    %1688 = vmatprep.subr.mxu0 0.0
    %1689 = vmatpush1.msra.mxu0 0.0
    %1690 = vmatprep.subr.mxu0 0.0
    %1691 = vmatpush1.msra.mxu0 0.0
    %1692 = vmatprep.subr.mxu0 0.0
    %1693 = vmatpush1.msra.mxu0 0.0
    %1694 = vmatprep.subr.mxu0 0.0
    %1695 = vmatpush1.msra.mxu0 0.0
    %1696 = vmatprep.subr.mxu0 0.0
    %1697 = vmatpush1.msra.mxu0 0.0
    %1698 = vmatprep.subr.mxu0 0.0
    %1699 = vmatpush1.msra.mxu0 0.0
    %1700 = vmatprep.mubr.f32.mxu0 0.0
    %1701 = vmatmul.mubr.f32.gmra.mrb[0].mxu0 %v1631
    %v1702 = vpop.f32.mrb[0].mxu0
    %v1703 = vadd.f32 %v1613, %v1702
    %v1704 = vpop.f32.mrb[0].mxu0
    %1705 = vmatprep.mubr.f32.mxu0 0.0
    %1706 = vmatmul.mubr.f32.gmra.mrb[0].mxu0 %v1634
    %v1707 = vpop.f32.mrb[0].mxu0
    %v1708 = vadd.f32 %v1613, %v1707
    %v1709 = vpop.f32.mrb[0].mxu0
    %1710 = vdwg.mxu0
    %v1711 = vadd.f32 %v157, %v1703
    %v1712 = vadd.f32 %v162, %v1708
    %v1713 = vsel %vm169, %v1711, 0.0
    %1714 = vadd.xlane.f32.xlu0 %v1713
    %v1715 = vpop.xlane.xlu0 %1714
    %v1716 = vsel %vm169, %v1712, 0.0
    %1717 = vadd.xlane.f32.xlu0 %v1716
    %v1718 = vpop.xlane.xlu0 %1717
    %v1719 = vrcp.pop 32.0
    %v1720 = vmul.f32 %v1715, %v1719
    %v1721 = vmul.f32 %v1718, %v1719
    %v1722 = vsub.f32 %v1711, %v1720
    %v1723 = vsub.f32 %v1712, %v1721
    %v1724 = vmul.f32 %v1722, %v1722
    %v1725 = vmul.f32 %v1723, %v1723
    %v1726 = vsel %vm169, %v1724, 0.0
    %1727 = vadd.xlane.f32.xlu0 %v1726
    %v1728 = vpop.xlane.xlu0 %1727
    %v1729 = vsel %vm169, %v1725, 0.0
    %1730 = vadd.xlane.f32.xlu0 %v1729
    %v1731 = vpop.xlane.xlu0 %1730
    %v1732 = vmul.f32 %v1728, %v1719
    %v1733 = vmul.f32 %v1731, %v1719
    %v1734 = vadd.f32 %v1732, 1e-05
    %v1735 = vadd.f32 %v1733, 1e-05
    %v1736 = vrsqrt.pop %v1734
    %v1737 = vrsqrt.pop %v1735
    %v1738 = vmul.f32 %v1722, %v1736
    %v1739 = vmul.f32 %v1723, %v1737
    %1741 = vrot.lane.b32.xlu0 %v1613, 64
    %v1742 = vpop.permute.xlu0 %1741
    %v1744 = vmul.f32 %v1738, %v1742
    %v1745 = vmul.f32 %v1739, %v1742
    %v1746 = vlaneseq
    %v1747 = vshrl.u32 %v1746, 7
    %v1748 = vsub.s32 0, %v1747
    %v1749 = vrot.slane %v65, %v1748
    %v1750 = vadd.f32 %v1744, %v1749
    %v1751 = vadd.f32 %v1745, %v1749
    %v1752 = vlaneseq
    %v1753 = vshrl.u32 %v1752, 7
    %v1754 = vsub.s32 0, %v1753
    %v1755 = vrot.slane %v63, %v1754
    %v1757 = vsel %vm169, %v1750, 0
    %v1760 = vsel %vm169, %v1751, 0
    %1762 = vmatprep.subr.mxu0 0.0
    %1763 = vmatpush1.msra.mxu0 %v58
    %1764 = vmatprep.subr.mxu0 0.0
    %1765 = vmatpush1.msra.mxu0 %v59
    %1766 = vmatprep.subr.mxu0 0.0
    %1767 = vmatpush1.msra.mxu0 %v60
    %1768 = vmatprep.subr.mxu0 0.0
    %1769 = vmatpush1.msra.mxu0 %v61
    %1770 = vmatprep.subr.mxu0 0.0
    %1771 = vmatpush1.msra.mxu0 0.0
    %1772 = vmatprep.subr.mxu0 0.0
    %1773 = vmatpush1.msra.mxu0 0.0
    %1774 = vmatprep.subr.mxu0 0.0
    %1775 = vmatpush1.msra.mxu0 0.0
    %1776 = vmatprep.subr.mxu0 0.0
    %1777 = vmatpush1.msra.mxu0 0.0
    %1778 = vmatprep.subr.mxu0 0.0
    %1779 = vmatpush1.msra.mxu0 0.0
    %1780 = vmatprep.subr.mxu0 0.0
    %1781 = vmatpush1.msra.mxu0 0.0
    %1782 = vmatprep.subr.mxu0 0.0
    %1783 = vmatpush1.msra.mxu0 0.0
    %1784 = vmatprep.subr.mxu0 0.0
    %1785 = vmatpush1.msra.mxu0 0.0
    %1786 = vmatprep.subr.mxu0 0.0
    %1787 = vmatpush1.msra.mxu0 0.0
    %1788 = vmatprep.subr.mxu0 0.0
    %1789 = vmatpush1.msra.mxu0 0.0
    %1790 = vmatprep.subr.mxu0 0.0
    %1791 = vmatpush1.msra.mxu0 0.0
    %1792 = vmatprep.subr.mxu0 0.0
    %1793 = vmatpush1.msra.mxu0 0.0
    %1794 = vmatprep.subr.mxu0 0.0
    %1795 = vmatpush1.msra.mxu0 0.0
    %1796 = vmatprep.subr.mxu0 0.0
    %1797 = vmatpush1.msra.mxu0 0.0
    %1798 = vmatprep.subr.mxu0 0.0
    %1799 = vmatpush1.msra.mxu0 0.0
    %1800 = vmatprep.subr.mxu0 0.0
    %1801 = vmatpush1.msra.mxu0 0.0
    %1802 = vmatprep.subr.mxu0 0.0
    %1803 = vmatpush1.msra.mxu0 0.0
    %1804 = vmatprep.subr.mxu0 0.0
    %1805 = vmatpush1.msra.mxu0 0.0
    %1806 = vmatprep.subr.mxu0 0.0
    %1807 = vmatpush1.msra.mxu0 0.0
    %1808 = vmatprep.subr.mxu0 0.0
    %1809 = vmatpush1.msra.mxu0 0.0
    %1810 = vmatprep.subr.mxu0 0.0
    %1811 = vmatpush1.msra.mxu0 0.0
    %1812 = vmatprep.subr.mxu0 0.0
    %1813 = vmatpush1.msra.mxu0 0.0
    %1814 = vmatprep.subr.mxu0 0.0
    %1815 = vmatpush1.msra.mxu0 0.0
    %1816 = vmatprep.subr.mxu0 0.0
    %1817 = vmatpush1.msra.mxu0 0.0
    %1818 = vmatprep.subr.mxu0 0.0
    %1819 = vmatpush1.msra.mxu0 0.0
    %1820 = vmatprep.subr.mxu0 0.0
    %1821 = vmatpush1.msra.mxu0 0.0
    %1822 = vmatprep.subr.mxu0 0.0
    %1823 = vmatpush1.msra.mxu0 0.0
    %1824 = vmatprep.subr.mxu0 0.0
    %1825 = vmatpush1.msra.mxu0 0.0
    %1826 = vmatprep.mubr.f32.mxu0 0.0
    %1827 = vmatmul.mubr.f32.gmra.mrb[0].mxu0 %v1757
    %v1828 = vpop.f32.mrb[0].mxu0
    %v1829 = vadd.f32 %v1755, %v1828
    %v1830 = vpop.f32.mrb[0].mxu0
    %1831 = vmatprep.mubr.f32.mxu0 0.0
    %1832 = vmatmul.mubr.f32.gmra.mrb[0].mxu0 %v1760
    %v1833 = vpop.f32.mrb[0].mxu0
    %v1834 = vadd.f32 %v1755, %v1833
    %v1835 = vpop.f32.mrb[0].mxu0
    %1836 = vdwg.mxu0
    %v1837 = vmul.f32 %v1829, %v1829
    %v1838 = vmul.f32 %v1834, %v1834
    %v1839 = vmul.f32 %v1829, %v1837
    %v1840 = vmul.f32 %v1834, %v1838
    %v1841 = vmul.f32 %v1839, 0.044715
    %v1842 = vmul.f32 %v1840, 0.044715
    %v1843 = vadd.f32 %v1829, %v1841
    %v1844 = vadd.f32 %v1834, %v1842
    %v1845 = vmul.f32 %v1843, 0.7978846
    %v1846 = vmul.f32 %v1844, 0.7978846
    %v1847 = vtanh.pop %v1845
    %v1848 = vtanh.pop %v1846
    %v1849 = vadd.f32 %v1847, 1.0
    %v1850 = vadd.f32 %v1848, 1.0
    %v1851 = vmul.f32 %v1849, 0.5
    %v1852 = vmul.f32 %v1850, 0.5
    %v1853 = vmul.f32 %v1829, %v1851
    %v1854 = vmul.f32 %v1834, %v1852
    %1863 = vrot.lane.b32.xlu0 %v46, 96
    %v1864 = vpop.permute.xlu0 %1863
    %1865 = vrot.lane.b32.xlu0 %v47, 96
    %v1866 = vpop.permute.xlu0 %1865
    %1867 = vrot.lane.b32.xlu0 %v48, 96
    %v1868 = vpop.permute.xlu0 %1867
    %1869 = vrot.lane.b32.xlu0 %v49, 96
    %v1870 = vpop.permute.xlu0 %1869
    %1871 = vrot.lane.b32.xlu0 %v50, 96
    %v1872 = vpop.permute.xlu0 %1871
    %1873 = vrot.lane.b32.xlu0 %v51, 96
    %v1874 = vpop.permute.xlu0 %1873
    %1875 = vrot.lane.b32.xlu0 %v52, 96
    %v1876 = vpop.permute.xlu0 %1875
    %1877 = vrot.lane.b32.xlu0 %v53, 96
    %v1878 = vpop.permute.xlu0 %1877
    %1887 = vrot.lane.b32.xlu0 %v1613, 96
    %v1888 = vpop.permute.xlu0 %1887
    %v1891 = vsel %vm83, %v1853, 0
    %v1894 = vsel %vm83, %v1854, 0
    %1896 = vmatprep.subr.mxu0 0.0
    %1897 = vmatpush1.msra.mxu0 %v1864
    %1898 = vmatprep.subr.mxu0 0.0
    %1899 = vmatpush1.msra.mxu0 %v1866
    %1900 = vmatprep.subr.mxu0 0.0
    %1901 = vmatpush1.msra.mxu0 %v1868
    %1902 = vmatprep.subr.mxu0 0.0
    %1903 = vmatpush1.msra.mxu0 %v1870
    %1904 = vmatprep.subr.mxu0 0.0
    %1905 = vmatpush1.msra.mxu0 %v1872
    %1906 = vmatprep.subr.mxu0 0.0
    %1907 = vmatpush1.msra.mxu0 %v1874
    %1908 = vmatprep.subr.mxu0 0.0
    %1909 = vmatpush1.msra.mxu0 %v1876
    %1910 = vmatprep.subr.mxu0 0.0
    %1911 = vmatpush1.msra.mxu0 %v1878
    %1912 = vmatprep.subr.mxu0 0.0
    %1913 = vmatpush1.msra.mxu0 0.0
    %1914 = vmatprep.subr.mxu0 0.0
    %1915 = vmatpush1.msra.mxu0 0.0
    %1916 = vmatprep.subr.mxu0 0.0
    %1917 = vmatpush1.msra.mxu0 0.0
    %1918 = vmatprep.subr.mxu0 0.0
    %1919 = vmatpush1.msra.mxu0 0.0
    %1920 = vmatprep.subr.mxu0 0.0
    %1921 = vmatpush1.msra.mxu0 0.0
    %1922 = vmatprep.subr.mxu0 0.0
    %1923 = vmatpush1.msra.mxu0 0.0
    %1924 = vmatprep.subr.mxu0 0.0
    %1925 = vmatpush1.msra.mxu0 0.0
    %1926 = vmatprep.subr.mxu0 0.0
    %1927 = vmatpush1.msra.mxu0 0.0
    %1928 = vmatprep.subr.mxu0 0.0
    %1929 = vmatpush1.msra.mxu0 0.0
    %1930 = vmatprep.subr.mxu0 0.0
    %1931 = vmatpush1.msra.mxu0 0.0
    %1932 = vmatprep.subr.mxu0 0.0
    %1933 = vmatpush1.msra.mxu0 0.0
    %1934 = vmatprep.subr.mxu0 0.0
    %1935 = vmatpush1.msra.mxu0 0.0
    %1936 = vmatprep.subr.mxu0 0.0
    %1937 = vmatpush1.msra.mxu0 0.0
    %1938 = vmatprep.subr.mxu0 0.0
    %1939 = vmatpush1.msra.mxu0 0.0
    %1940 = vmatprep.subr.mxu0 0.0
    %1941 = vmatpush1.msra.mxu0 0.0
    %1942 = vmatprep.subr.mxu0 0.0
    %1943 = vmatpush1.msra.mxu0 0.0
    %1944 = vmatprep.subr.mxu0 0.0
    %1945 = vmatpush1.msra.mxu0 0.0
    %1946 = vmatprep.subr.mxu0 0.0
    %1947 = vmatpush1.msra.mxu0 0.0
    %1948 = vmatprep.subr.mxu0 0.0
    %1949 = vmatpush1.msra.mxu0 0.0
    %1950 = vmatprep.subr.mxu0 0.0
    %1951 = vmatpush1.msra.mxu0 0.0
    %1952 = vmatprep.subr.mxu0 0.0
    %1953 = vmatpush1.msra.mxu0 0.0
    %1954 = vmatprep.subr.mxu0 0.0
    %1955 = vmatpush1.msra.mxu0 0.0
    %1956 = vmatprep.subr.mxu0 0.0
    %1957 = vmatpush1.msra.mxu0 0.0
    %1958 = vmatprep.subr.mxu0 0.0
    %1959 = vmatpush1.msra.mxu0 0.0
    %1960 = vmatprep.mubr.f32.mxu0 0.0
    %1961 = vmatmul.mubr.f32.gmra.mrb[0].mxu0 %v1891
    %v1962 = vpop.f32.mrb[0].mxu0
    %v1963 = vadd.f32 %v1888, %v1962
    %v1964 = vpop.f32.mrb[0].mxu0
    %1965 = vmatprep.mubr.f32.mxu0 0.0
    %1966 = vmatmul.mubr.f32.gmra.mrb[0].mxu0 %v1894
    %v1967 = vpop.f32.mrb[0].mxu0
    %v1968 = vadd.f32 %v1888, %v1967
    %v1969 = vpop.f32.mrb[0].mxu0
    %1970 = vdwg.mxu0
    %v1971 = vadd.f32 %v1750, %v1963
    %v1972 = vadd.f32 %v1751, %v1968
    %v1973 = vsel %vm169, %v1971, 0.0
    %1974 = vadd.xlane.f32.xlu0 %v1973
    %v1975 = vpop.xlane.xlu0 %1974
    %v1976 = vsel %vm169, %v1972, 0.0
    %1977 = vadd.xlane.f32.xlu0 %v1976
    %v1978 = vpop.xlane.xlu0 %1977
    %v1979 = vmul.f32 %v1975, %v1719
    %v1980 = vmul.f32 %v1978, %v1719
    %v1981 = vsub.f32 %v1971, %v1979
    %v1982 = vsub.f32 %v1972, %v1980
    %v1983 = vmul.f32 %v1981, %v1981
    %v1984 = vmul.f32 %v1982, %v1982
    %v1985 = vsel %vm169, %v1983, 0.0
    %1986 = vadd.xlane.f32.xlu0 %v1985
    %v1987 = vpop.xlane.xlu0 %1986
    %v1988 = vsel %vm169, %v1984, 0.0
    %1989 = vadd.xlane.f32.xlu0 %v1988
    %v1990 = vpop.xlane.xlu0 %1989
    %v1991 = vmul.f32 %v1987, %v1719
    %v1992 = vmul.f32 %v1990, %v1719
    %v1993 = vadd.f32 %v1991, 1e-05
    %v1994 = vadd.f32 %v1992, 1e-05
    %v1995 = vrsqrt.pop %v1993
    %v1996 = vrsqrt.pop %v1994
    %v1997 = vmul.f32 %v1981, %v1995
    %v1998 = vmul.f32 %v1982, %v1996
    %2000 = vrot.lane.b32.xlu0 %v1749, 96
    %v2001 = vpop.permute.xlu0 %2000
    %v2003 = vmul.f32 %v1997, %v2001
    %v2004 = vmul.f32 %v1998, %v2001
    %2005 = vrot.lane.b32.xlu0 %v1749, 64
    %v2006 = vpop.permute.xlu0 %2005
    %v2008 = vadd.f32 %v2003, %v2006
    %v2009 = vadd.f32 %v2004, %v2006
    %2010 = vst.msk [vmem:[#allocation7] sm:$0xff] %vm169, %v2008
    %2011 = vst.msk [vmem:[#allocation7 + $0x8] sm:$0xff] %vm169, %v2009
    // Predicated region
    $region26: #{encoder_forward.1} parent=1 // pred_check
      _
    $region27: #{encoder_forward.1} parent=1 // pred_check_branch
      %2013 = sbr.rel (0) target = $region29
    $region28: #{encoder_forward.1} parent=1 // pred_region
      %s2015 = ssub.s32 256, 256
      %2016 = vsyncadd [#allocation4], %s2015
      %s2017 = sshll.u32 [#allocation7], 4
      %s2018 = int_to_ptr.vmem [resolvable:$true] %s2017
      %2023 = dma.vmem_to_hbm [thread:$0]  %s2018, 256, %s4, [#allocation4], 128, 128, 8
    $region29: #{encoder_forward.1} parent=1 // pred_fallthru
      _
    // Predicated region
    $region30: #{encoder_forward.1} parent=1 // pred_check
      _
    $region31: #{encoder_forward.1} parent=1 // pred_check_branch
      %2025 = sbr.rel (0) target = $region33
    $region32: #{encoder_forward.1} parent=1 // pred_region
      %2026 = dma.done [#allocation4], 256
    $region33: #{encoder_forward.1} parent=1 // pred_fallthru
      _
    %2027 = vsyncpa [#allocation3], 1
    %2028 = vsyncpa [#allocation6], 1
    %2029 = vsyncpa [#allocation4], 1

</llo_original>
